<compile_context>
chip_gen: v7x
topology: tpu7x:2x2x1
jax: 0.10.0
libtpu: 0.0.40
codegen_flags: <defaults>
</compile_context>

<pallas_src>
import jax
import jax.numpy as jnp
from jax.experimental import pallas as pl
from jax.experimental.pallas import tpu as pltpu

# ---- synthetic model hyper-params (small, consistent with the forward) ----
B = 2              # batch
L = 8              # sequence length
BL = B * L         # total tokens
H = 32             # hidden_size of the "pretrained" encoder
NH = 2             # attention heads
DH = H // NH       # head dim
F = 64             # FFN intermediate size
V = 100            # vocab size
NUM_LABELS = 3     # num_labels of the classifier
LANES = 128        # lane-dense slab width / padded logits width

# ---- packed weight-slab row offsets (static layout, lanes are 128 wide) ----
R_WQKV = 0             # rows [  0, 32): lanes [0,96) wqkv (1/sqrt(DH) folded into Q),
                       #                 lanes [96,128) wo
R_W1 = R_WQKV + H      # rows [ 32, 64): lanes [0,64)  w1
R_W2 = R_W1 + H        # rows [ 64,128): lanes [0,32)  w2
R_WC = R_W2 + F        # rows [128,160): classifier weight zero-padded to 128 lanes
R_VEC = R_WC + H       # row 160: bqkv | bo
                       # row 161: b1 | ln1_g | ln1_b
                       # row 162: b2 | ln2_g | ln2_b
                       # row 163: bc (zero-padded to 128 lanes)
R_POS = R_VEC + 4      # rows [164,180): lanes [0,32) pos-emb tiled to (B*L, H),
                       #                 lanes [32,48) block-diagonal attention bias
SLAB_ROWS = 184        # 180 rows used, rounded up to a multiple of 8


def _layernorm(x, gamma, beta, eps=1e-12):
    mu = jnp.mean(x, axis=-1, keepdims=True)
    var = jnp.mean((x - mu) ** 2, axis=-1, keepdims=True)
    return (x - mu) * jax.lax.rsqrt(var + eps) * gamma + beta


# ---------- single fused kernel: embed + encoder layer + CLS + classifier ----
def fused_nli_kernel(ids_ref, amask_ref, w_ref, temb_ref, logits_ref, xbuf_ref):
    # 1) Embedding gather (ids live in SMEM; table is (V, 1, H) resident in
    #    VMEM so the gather is a dynamic *leading-dim* index), plus pos add.
    for t in range(BL):
        b, l = divmod(t, L)
        idx = ids_ref[b, l]                                  # SMEM scalar read
        xbuf_ref[pl.ds(t, 1), :] = temb_ref[idx]             # (1, H) row copy
    x = xbuf_ref[...] + w_ref[R_POS:R_POS + BL, 0:H]         # (BL, H)

    # 2) Additive attention bias: constant block-diagonal (cross-batch -1e9)
    #    + key-padding mask built in-kernel from the SMEM attention_mask.
    lane = jax.lax.broadcasted_iota(jnp.int32, (1, BL), 1)
    keyneg = jnp.zeros((1, BL), jnp.float32)
    for t in range(BL):
        b, l = divmod(t, L)
        m = amask_ref[b, l]
        negval = (m.astype(jnp.float32) - 1.0) * 1e9          # 0 if kept, -1e9 if padded
        keyneg = jnp.where(lane == t, negval, keyneg)
    bias = w_ref[R_POS:R_POS + BL, H:H + BL] + keyneg         # (BL, BL)

    # 3) Fused QKV over all B*L tokens (scale pre-folded into the Q columns).
    qkv = (jnp.dot(x, w_ref[R_WQKV:R_WQKV + H, 0:3 * H],
                   preferred_element_type=jnp.float32)
           + w_ref[R_VEC:R_VEC + 1, 0:3 * H])                 # (BL, 3H)

    # 4) Attention: one (BL,BL) score block per head; block-diag bias handles
    #    the cross-batch separation, so no per-batch loop / concatenations.
    ctx_heads = []
    for h in range(NH):
        q = qkv[:, h * DH:(h + 1) * DH]                       # (BL, DH) pre-scaled
        k = qkv[:, H + h * DH:H + (h + 1) * DH]               # (BL, DH)
        v = qkv[:, 2 * H + h * DH:2 * H + (h + 1) * DH]       # (BL, DH)
        s = jax.lax.dot_general(q, k, (((1,), (1,)), ((), ())),
                                preferred_element_type=jnp.float32) + bias
        s = s - jnp.max(s, axis=-1, keepdims=True)
        p = jnp.exp(s)
        p = p / jnp.sum(p, axis=-1, keepdims=True)            # exact softmax divide
        ctx_heads.append(jnp.dot(p, v, preferred_element_type=jnp.float32))
    ctx = jnp.concatenate(ctx_heads, axis=-1)                 # (BL, H)

    attn = (jnp.dot(ctx, w_ref[R_WQKV:R_WQKV + H, 3 * H:4 * H],
                    preferred_element_type=jnp.float32)
            + w_ref[R_VEC:R_VEC + 1, 3 * H:4 * H])
    h1 = _layernorm(x + attn,
                    w_ref[R_VEC + 1:R_VEC + 2, F:F + H],
                    w_ref[R_VEC + 1:R_VEC + 2, F + H:F + 2 * H])   # (BL, H)

    # 5) CLS pooling via one strided sublane load; FFN / LN2 / classifier are
    #    row-wise, so only the CLS rows are computed (output is identical).
    xbuf_ref[...] = h1                                        # reuse gather scratch
    cls = xbuf_ref[pl.ds(0, B, stride=L), :]                  # (B, H): rows 0 and L

    ff = (jnp.dot(cls, w_ref[R_W1:R_W1 + H, 0:F],
                  preferred_element_type=jnp.float32)
          + w_ref[R_VEC + 1:R_VEC + 2, 0:F])
    # TODO(synk): HF BERT / torch nn.GELU use exact erf-GELU; tanh approx kept here.
    ff = jax.nn.gelu(ff)
    ff = (jnp.dot(ff, w_ref[R_W2:R_W2 + F, 0:H],
                  preferred_element_type=jnp.float32)
          + w_ref[R_VEC + 2:R_VEC + 3, 0:H])
    cls_h = _layernorm(cls + ff,
                       w_ref[R_VEC + 2:R_VEC + 3, H:2 * H],
                       w_ref[R_VEC + 2:R_VEC + 3, 2 * H:3 * H])    # (B, H)

    # 6) Lane-dense classifier (nn.Dropout(0.1) = identity at inference).
    #    Real logits are columns [:NUM_LABELS]; consumer slices outside.
    logits_ref[...] = (jnp.dot(cls_h, w_ref[R_WC:R_WC + H, :],
                               preferred_element_type=jnp.float32)
                       + w_ref[R_VEC + 3:R_VEC + 4, :])


# ------------------------------ parameter handling ---------------------------
def init_params(key):
    ks = jax.random.split(key, 10)
    n = lambda k, shp: jax.random.normal(k, shp, jnp.float32) * 0.02
    return dict(
        tok_emb=n(ks[0], (V, H)),
        pos_emb=n(ks[1], (L, H)),
        # head h occupies columns [h*DH:(h+1)*DH] of each projection
        wq=n(ks[2], (H, H)), bq=jnp.zeros((1, H), jnp.float32),
        wk=n(ks[3], (H, H)), bk=jnp.zeros((1, H), jnp.float32),
        wv=n(ks[4], (H, H)), bv=jnp.zeros((1, H), jnp.float32),
        wo=n(ks[5], (H, H)), bo=jnp.zeros((1, H), jnp.float32),
        ln1_g=jnp.ones((1, H), jnp.float32), ln1_b=jnp.zeros((1, H), jnp.float32),
        w1=n(ks[6], (H, F)), b1=jnp.zeros((1, F), jnp.float32),
        w2=n(ks[7], (F, H)), b2=jnp.zeros((1, H), jnp.float32),
        ln2_g=jnp.ones((1, H), jnp.float32), ln2_b=jnp.zeros((1, H), jnp.float32),
        wc=n(ks[8], (H, NUM_LABELS)), bc=jnp.zeros((1, NUM_LABELS), jnp.float32),
    )


def prepare_packed_params(params):
    """One-time packing of every weight into a single lane-dense f32 slab
    plus a (V, 1, H) embedding table.  Called ONCE, outside the per-call jit."""
    scale = 1.0 / jnp.sqrt(jnp.float32(DH))
    wqkv = jnp.concatenate([params['wq'] * scale, params['wk'], params['wv']], axis=1)
    bqkv = jnp.concatenate([params['bq'] * scale, params['bk'], params['bv']], axis=1)

    seq_id = jnp.arange(BL) // L
    blockdiag = jnp.where(seq_id[:, None] == seq_id[None, :], 0.0, -1e9)
    pos_tiled = jnp.tile(params['pos_emb'], (B, 1))                     # (BL, H)

    w = jnp.zeros((SLAB_ROWS, LANES), jnp.float32)
    w = w.at[R_WQKV:R_WQKV + H, 0:3 * H].set(wqkv)
    w = w.at[R_WQKV:R_WQKV + H, 3 * H:4 * H].set(params['wo'])
    w = w.at[R_W1:R_W1 + H, 0:F].set(params['w1'])
    w = w.at[R_W2:R_W2 + F, 0:H].set(params['w2'])
    w = w.at[R_WC:R_WC + H, 0:NUM_LABELS].set(params['wc'])
    w = w.at[R_VEC, 0:3 * H].set(bqkv[0])
    w = w.at[R_VEC, 3 * H:4 * H].set(params['bo'][0])
    w = w.at[R_VEC + 1, 0:F].set(params['b1'][0])
    w = w.at[R_VEC + 1, F:F + H].set(params['ln1_g'][0])
    w = w.at[R_VEC + 1, F + H:F + 2 * H].set(params['ln1_b'][0])
    w = w.at[R_VEC + 2, 0:H].set(params['b2'][0])
    w = w.at[R_VEC + 2, H:2 * H].set(params['ln2_g'][0])
    w = w.at[R_VEC + 2, 2 * H:3 * H].set(params['ln2_b'][0])
    w = w.at[R_VEC + 3, 0:NUM_LABELS].set(params['bc'][0])
    w = w.at[R_POS:R_POS + BL, 0:H].set(pos_tiled)
    w = w.at[R_POS:R_POS + BL, H:H + BL].set(blockdiag.astype(jnp.float32))

    tok_emb3 = params['tok_emb'].astype(jnp.float32).reshape(V, 1, H)
    return w, tok_emb3


# ------------------------------ forward --------------------------------------
@jax.jit
def nli_forward_padded(input_ids, attention_mask, wslab, tok_emb):
    """Single gridless pallas_call for the whole forward pass.

    Returns lane-dense (B, 128) logits; the real logits are columns
    [:NUM_LABELS] (sliced by the consumer to avoid an extra tiny XLA op here).
    """
    flops = 2 * (BL * H * 3 * H + NH * 2 * BL * BL * DH + BL * H * H
                 + B * H * F + B * F * H + B * H * LANES)
    cost = pl.CostEstimate(
        flops=flops,
        transcendentals=NH * BL * BL + B * F,
        bytes_accessed=(SLAB_ROWS * LANES + V * H + BL * H + B * LANES) * 4)

    return pl.pallas_call(
        fused_nli_kernel,
        out_shape=jax.ShapeDtypeStruct((B, LANES), jnp.float32),
        in_specs=[
            pl.BlockSpec(memory_space=pltpu.MemorySpace.SMEM),   # input_ids (B, L)
            pl.BlockSpec(memory_space=pltpu.MemorySpace.SMEM),   # attention_mask (B, L)
            pl.BlockSpec(memory_space=pltpu.MemorySpace.VMEM),   # packed weight slab
            pl.BlockSpec(memory_space=pltpu.MemorySpace.VMEM),   # (V, 1, H) emb table
        ],
        out_specs=pl.BlockSpec(memory_space=pltpu.MemorySpace.VMEM),
        scratch_shapes=[pltpu.VMEM((BL, H), jnp.float32)],       # gather / h1 staging
        cost_estimate=cost,
    )(input_ids, attention_mask, wslab, tok_emb)


if __name__ == "__main__":
    key = jax.random.PRNGKey(0)
    pkey, ikey = jax.random.split(key)
    params = init_params(pkey)
    wslab, tok_emb = prepare_packed_params(params)     # one-time weight packing
    wslab = jax.device_put(wslab)
    tok_emb = jax.device_put(tok_emb)

    input_ids = jax.random.randint(ikey, (B, L), 0, V, dtype=jnp.int32)
    attention_mask = jnp.array([[1] * L, [1] * (L - 2) + [0] * 2], dtype=jnp.int32)

    logits_padded = nli_forward_padded(input_ids, attention_mask, wslab, tok_emb)
    jax.block_until_ready(logits_padded)
    logits = logits_padded[:, :NUM_LABELS]             # consumer-side slice
    assert logits.shape == (B, NUM_LABELS) and logits.dtype == jnp.float32
    print("KERNEL_OK")
</pallas_src>

<mosaic_0001>
module attributes {stable_mosaic.version = 11 : i64} {
  func.func @fused_nli_kernel(%arg0: memref<2x8xi32, #tpu.memory_space<smem>>, %arg1: memref<2x8xi32, #tpu.memory_space<smem>>, %arg2: memref<184x128xf32, #tpu.memory_space<vmem>>, %arg3: memref<100x1x32xf32, #tpu.memory_space<vmem>>, %arg4: memref<2x128xf32, #tpu.memory_space<vmem>>, %arg5: memref<16x32xf32, #tpu.memory_space<vmem>>) attributes {dimension_semantics = [], scalar_prefetch = 0 : i64, scratch_operands = 1 : i64, tpu.core_type = #tpu.core_type<tc>} {
    %c0 = arith.constant 0 : index
    %c0_0 = arith.constant 0 : index
    %0 = memref.load %arg0[%c0, %c0_0] : memref<2x8xi32, #tpu.memory_space<smem>>
    %1 = arith.index_cast %0 : i32 to index
    %c0_1 = arith.constant 0 : index
    %c0_2 = arith.constant 0 : index
    %2 = vector.load %arg3[%1, %c0_1, %c0_2] : memref<100x1x32xf32, #tpu.memory_space<vmem>>, vector<1x1x32xf32>
    %3 = vector.shape_cast %2 : vector<1x1x32xf32> to vector<1x32xf32>
    %c0_3 = arith.constant 0 : index
    %c0_4 = arith.constant 0 : index
    %4 = vector.load %arg5[%c0_3, %c0_4] : memref<16x32xf32, #tpu.memory_space<vmem>>, vector<1x32xf32>
    tpu.vector_store %arg5[%c0_3, %c0_4], %3 {strides = array<i32>} : memref<16x32xf32, #tpu.memory_space<vmem>>, vector<1x32xf32>,
    %c0_5 = arith.constant 0 : index
    %c1 = arith.constant 1 : index
    %5 = memref.load %arg0[%c0_5, %c1] : memref<2x8xi32, #tpu.memory_space<smem>>
    %6 = arith.index_cast %5 : i32 to index
    %c0_6 = arith.constant 0 : index
    %c0_7 = arith.constant 0 : index
    %7 = vector.load %arg3[%6, %c0_6, %c0_7] : memref<100x1x32xf32, #tpu.memory_space<vmem>>, vector<1x1x32xf32>
    %8 = vector.shape_cast %7 : vector<1x1x32xf32> to vector<1x32xf32>
    %c1_8 = arith.constant 1 : index
    %c0_9 = arith.constant 0 : index
    %9 = vector.load %arg5[%c1_8, %c0_9] : memref<16x32xf32, #tpu.memory_space<vmem>>, vector<1x32xf32>
    tpu.vector_store %arg5[%c1_8, %c0_9], %8 {strides = array<i32>} : memref<16x32xf32, #tpu.memory_space<vmem>>, vector<1x32xf32>,
    %c0_10 = arith.constant 0 : index
    %c2 = arith.constant 2 : index
    %10 = memref.load %arg0[%c0_10, %c2] : memref<2x8xi32, #tpu.memory_space<smem>>
    %11 = arith.index_cast %10 : i32 to index
    %c0_11 = arith.constant 0 : index
    %c0_12 = arith.constant 0 : index
    %12 = vector.load %arg3[%11, %c0_11, %c0_12] : memref<100x1x32xf32, #tpu.memory_space<vmem>>, vector<1x1x32xf32>
    %13 = vector.shape_cast %12 : vector<1x1x32xf32> to vector<1x32xf32>
    %c2_13 = arith.constant 2 : index
    %c0_14 = arith.constant 0 : index
    %14 = vector.load %arg5[%c2_13, %c0_14] : memref<16x32xf32, #tpu.memory_space<vmem>>, vector<1x32xf32>
    tpu.vector_store %arg5[%c2_13, %c0_14], %13 {strides = array<i32>} : memref<16x32xf32, #tpu.memory_space<vmem>>, vector<1x32xf32>,
    %c0_15 = arith.constant 0 : index
    %c3 = arith.constant 3 : index
    %15 = memref.load %arg0[%c0_15, %c3] : memref<2x8xi32, #tpu.memory_space<smem>>
    %16 = arith.index_cast %15 : i32 to index
    %c0_16 = arith.constant 0 : index
    %c0_17 = arith.constant 0 : index
    %17 = vector.load %arg3[%16, %c0_16, %c0_17] : memref<100x1x32xf32, #tpu.memory_space<vmem>>, vector<1x1x32xf32>
    %18 = vector.shape_cast %17 : vector<1x1x32xf32> to vector<1x32xf32>
    %c3_18 = arith.constant 3 : index
    %c0_19 = arith.constant 0 : index
    %19 = vector.load %arg5[%c3_18, %c0_19] : memref<16x32xf32, #tpu.memory_space<vmem>>, vector<1x32xf32>
    tpu.vector_store %arg5[%c3_18, %c0_19], %18 {strides = array<i32>} : memref<16x32xf32, #tpu.memory_space<vmem>>, vector<1x32xf32>,
    %c0_20 = arith.constant 0 : index
    %c4 = arith.constant 4 : index
    %20 = memref.load %arg0[%c0_20, %c4] : memref<2x8xi32, #tpu.memory_space<smem>>
    %21 = arith.index_cast %20 : i32 to index
    %c0_21 = arith.constant 0 : index
    %c0_22 = arith.constant 0 : index
    %22 = vector.load %arg3[%21, %c0_21, %c0_22] : memref<100x1x32xf32, #tpu.memory_space<vmem>>, vector<1x1x32xf32>
    %23 = vector.shape_cast %22 : vector<1x1x32xf32> to vector<1x32xf32>
    %c4_23 = arith.constant 4 : index
    %c0_24 = arith.constant 0 : index
    %24 = vector.load %arg5[%c4_23, %c0_24] : memref<16x32xf32, #tpu.memory_space<vmem>>, vector<1x32xf32>
    tpu.vector_store %arg5[%c4_23, %c0_24], %23 {strides = array<i32>} : memref<16x32xf32, #tpu.memory_space<vmem>>, vector<1x32xf32>,
    %c0_25 = arith.constant 0 : index
    %c5 = arith.constant 5 : index
    %25 = memref.load %arg0[%c0_25, %c5] : memref<2x8xi32, #tpu.memory_space<smem>>
    %26 = arith.index_cast %25 : i32 to index
    %c0_26 = arith.constant 0 : index
    %c0_27 = arith.constant 0 : index
    %27 = vector.load %arg3[%26, %c0_26, %c0_27] : memref<100x1x32xf32, #tpu.memory_space<vmem>>, vector<1x1x32xf32>
    %28 = vector.shape_cast %27 : vector<1x1x32xf32> to vector<1x32xf32>
    %c5_28 = arith.constant 5 : index
    %c0_29 = arith.constant 0 : index
    %29 = vector.load %arg5[%c5_28, %c0_29] : memref<16x32xf32, #tpu.memory_space<vmem>>, vector<1x32xf32>
    tpu.vector_store %arg5[%c5_28, %c0_29], %28 {strides = array<i32>} : memref<16x32xf32, #tpu.memory_space<vmem>>, vector<1x32xf32>,
    %c0_30 = arith.constant 0 : index
    %c6 = arith.constant 6 : index
    %30 = memref.load %arg0[%c0_30, %c6] : memref<2x8xi32, #tpu.memory_space<smem>>
    %31 = arith.index_cast %30 : i32 to index
    %c0_31 = arith.constant 0 : index
    %c0_32 = arith.constant 0 : index
    %32 = vector.load %arg3[%31, %c0_31, %c0_32] : memref<100x1x32xf32, #tpu.memory_space<vmem>>, vector<1x1x32xf32>
    %33 = vector.shape_cast %32 : vector<1x1x32xf32> to vector<1x32xf32>
    %c6_33 = arith.constant 6 : index
    %c0_34 = arith.constant 0 : index
    %34 = vector.load %arg5[%c6_33, %c0_34] : memref<16x32xf32, #tpu.memory_space<vmem>>, vector<1x32xf32>
    tpu.vector_store %arg5[%c6_33, %c0_34], %33 {strides = array<i32>} : memref<16x32xf32, #tpu.memory_space<vmem>>, vector<1x32xf32>,
    %c0_35 = arith.constant 0 : index
    %c7 = arith.constant 7 : index
    %35 = memref.load %arg0[%c0_35, %c7] : memref<2x8xi32, #tpu.memory_space<smem>>
    %36 = arith.index_cast %35 : i32 to index
    %c0_36 = arith.constant 0 : index
    %c0_37 = arith.constant 0 : index
    %37 = vector.load %arg3[%36, %c0_36, %c0_37] : memref<100x1x32xf32, #tpu.memory_space<vmem>>, vector<1x1x32xf32>
    %38 = vector.shape_cast %37 : vector<1x1x32xf32> to vector<1x32xf32>
    %c7_38 = arith.constant 7 : index
    %c0_39 = arith.constant 0 : index
    %39 = vector.load %arg5[%c7_38, %c0_39] : memref<16x32xf32, #tpu.memory_space<vmem>>, vector<1x32xf32>
    tpu.vector_store %arg5[%c7_38, %c0_39], %38 {strides = array<i32>} : memref<16x32xf32, #tpu.memory_space<vmem>>, vector<1x32xf32>,
    %c1_40 = arith.constant 1 : index
    %c0_41 = arith.constant 0 : index
    %40 = memref.load %arg0[%c1_40, %c0_41] : memref<2x8xi32, #tpu.memory_space<smem>>
    %41 = arith.index_cast %40 : i32 to index
    %c0_42 = arith.constant 0 : index
    %c0_43 = arith.constant 0 : index
    %42 = vector.load %arg3[%41, %c0_42, %c0_43] : memref<100x1x32xf32, #tpu.memory_space<vmem>>, vector<1x1x32xf32>
    %43 = vector.shape_cast %42 : vector<1x1x32xf32> to vector<1x32xf32>
    %c8 = arith.constant 8 : index
    %c0_44 = arith.constant 0 : index
    %44 = vector.load %arg5[%c8, %c0_44] : memref<16x32xf32, #tpu.memory_space<vmem>>, vector<1x32xf32>
    tpu.vector_store %arg5[%c8, %c0_44], %43 {strides = array<i32>} : memref<16x32xf32, #tpu.memory_space<vmem>>, vector<1x32xf32>,
    %c1_45 = arith.constant 1 : index
    %c1_46 = arith.constant 1 : index
    %45 = memref.load %arg0[%c1_45, %c1_46] : memref<2x8xi32, #tpu.memory_space<smem>>
    %46 = arith.index_cast %45 : i32 to index
    %c0_47 = arith.constant 0 : index
    %c0_48 = arith.constant 0 : index
    %47 = vector.load %arg3[%46, %c0_47, %c0_48] : memref<100x1x32xf32, #tpu.memory_space<vmem>>, vector<1x1x32xf32>
    %48 = vector.shape_cast %47 : vector<1x1x32xf32> to vector<1x32xf32>
    %c9 = arith.constant 9 : index
    %c0_49 = arith.constant 0 : index
    %49 = vector.load %arg5[%c9, %c0_49] : memref<16x32xf32, #tpu.memory_space<vmem>>, vector<1x32xf32>
    tpu.vector_store %arg5[%c9, %c0_49], %48 {strides = array<i32>} : memref<16x32xf32, #tpu.memory_space<vmem>>, vector<1x32xf32>,
    %c1_50 = arith.constant 1 : index
    %c2_51 = arith.constant 2 : index
    %50 = memref.load %arg0[%c1_50, %c2_51] : memref<2x8xi32, #tpu.memory_space<smem>>
    %51 = arith.index_cast %50 : i32 to index
    %c0_52 = arith.constant 0 : index
    %c0_53 = arith.constant 0 : index
    %52 = vector.load %arg3[%51, %c0_52, %c0_53] : memref<100x1x32xf32, #tpu.memory_space<vmem>>, vector<1x1x32xf32>
    %53 = vector.shape_cast %52 : vector<1x1x32xf32> to vector<1x32xf32>
    %c10 = arith.constant 10 : index
    %c0_54 = arith.constant 0 : index
    %54 = vector.load %arg5[%c10, %c0_54] : memref<16x32xf32, #tpu.memory_space<vmem>>, vector<1x32xf32>
    tpu.vector_store %arg5[%c10, %c0_54], %53 {strides = array<i32>} : memref<16x32xf32, #tpu.memory_space<vmem>>, vector<1x32xf32>,
    %c1_55 = arith.constant 1 : index
    %c3_56 = arith.constant 3 : index
    %55 = memref.load %arg0[%c1_55, %c3_56] : memref<2x8xi32, #tpu.memory_space<smem>>
    %56 = arith.index_cast %55 : i32 to index
    %c0_57 = arith.constant 0 : index
    %c0_58 = arith.constant 0 : index
    %57 = vector.load %arg3[%56, %c0_57, %c0_58] : memref<100x1x32xf32, #tpu.memory_space<vmem>>, vector<1x1x32xf32>
    %58 = vector.shape_cast %57 : vector<1x1x32xf32> to vector<1x32xf32>
    %c11 = arith.constant 11 : index
    %c0_59 = arith.constant 0 : index
    %59 = vector.load %arg5[%c11, %c0_59] : memref<16x32xf32, #tpu.memory_space<vmem>>, vector<1x32xf32>
    tpu.vector_store %arg5[%c11, %c0_59], %58 {strides = array<i32>} : memref<16x32xf32, #tpu.memory_space<vmem>>, vector<1x32xf32>,
    %c1_60 = arith.constant 1 : index
    %c4_61 = arith.constant 4 : index
    %60 = memref.load %arg0[%c1_60, %c4_61] : memref<2x8xi32, #tpu.memory_space<smem>>
    %61 = arith.index_cast %60 : i32 to index
    %c0_62 = arith.constant 0 : index
    %c0_63 = arith.constant 0 : index
    %62 = vector.load %arg3[%61, %c0_62, %c0_63] : memref<100x1x32xf32, #tpu.memory_space<vmem>>, vector<1x1x32xf32>
    %63 = vector.shape_cast %62 : vector<1x1x32xf32> to vector<1x32xf32>
    %c12 = arith.constant 12 : index
    %c0_64 = arith.constant 0 : index
    %64 = vector.load %arg5[%c12, %c0_64] : memref<16x32xf32, #tpu.memory_space<vmem>>, vector<1x32xf32>
    tpu.vector_store %arg5[%c12, %c0_64], %63 {strides = array<i32>} : memref<16x32xf32, #tpu.memory_space<vmem>>, vector<1x32xf32>,
    %c1_65 = arith.constant 1 : index
    %c5_66 = arith.constant 5 : index
    %65 = memref.load %arg0[%c1_65, %c5_66] : memref<2x8xi32, #tpu.memory_space<smem>>
    %66 = arith.index_cast %65 : i32 to index
    %c0_67 = arith.constant 0 : index
    %c0_68 = arith.constant 0 : index
    %67 = vector.load %arg3[%66, %c0_67, %c0_68] : memref<100x1x32xf32, #tpu.memory_space<vmem>>, vector<1x1x32xf32>
    %68 = vector.shape_cast %67 : vector<1x1x32xf32> to vector<1x32xf32>
    %c13 = arith.constant 13 : index
    %c0_69 = arith.constant 0 : index
    %69 = vector.load %arg5[%c13, %c0_69] : memref<16x32xf32, #tpu.memory_space<vmem>>, vector<1x32xf32>
    tpu.vector_store %arg5[%c13, %c0_69], %68 {strides = array<i32>} : memref<16x32xf32, #tpu.memory_space<vmem>>, vector<1x32xf32>,
    %c1_70 = arith.constant 1 : index
    %c6_71 = arith.constant 6 : index
    %70 = memref.load %arg0[%c1_70, %c6_71] : memref<2x8xi32, #tpu.memory_space<smem>>
    %71 = arith.index_cast %70 : i32 to index
    %c0_72 = arith.constant 0 : index
    %c0_73 = arith.constant 0 : index
    %72 = vector.load %arg3[%71, %c0_72, %c0_73] : memref<100x1x32xf32, #tpu.memory_space<vmem>>, vector<1x1x32xf32>
    %73 = vector.shape_cast %72 : vector<1x1x32xf32> to vector<1x32xf32>
    %c14 = arith.constant 14 : index
    %c0_74 = arith.constant 0 : index
    %74 = vector.load %arg5[%c14, %c0_74] : memref<16x32xf32, #tpu.memory_space<vmem>>, vector<1x32xf32>
    tpu.vector_store %arg5[%c14, %c0_74], %73 {strides = array<i32>} : memref<16x32xf32, #tpu.memory_space<vmem>>, vector<1x32xf32>,
    %c1_75 = arith.constant 1 : index
    %c7_76 = arith.constant 7 : index
    %75 = memref.load %arg0[%c1_75, %c7_76] : memref<2x8xi32, #tpu.memory_space<smem>>
    %76 = arith.index_cast %75 : i32 to index
    %c0_77 = arith.constant 0 : index
    %c0_78 = arith.constant 0 : index
    %77 = vector.load %arg3[%76, %c0_77, %c0_78] : memref<100x1x32xf32, #tpu.memory_space<vmem>>, vector<1x1x32xf32>
    %78 = vector.shape_cast %77 : vector<1x1x32xf32> to vector<1x32xf32>
    %c15 = arith.constant 15 : index
    %c0_79 = arith.constant 0 : index
    %79 = vector.load %arg5[%c15, %c0_79] : memref<16x32xf32, #tpu.memory_space<vmem>>, vector<1x32xf32>
    tpu.vector_store %arg5[%c15, %c0_79], %78 {strides = array<i32>} : memref<16x32xf32, #tpu.memory_space<vmem>>, vector<1x32xf32>,
    %c0_80 = arith.constant 0 : index
    %c0_81 = arith.constant 0 : index
    %80 = vector.load %arg5[%c0_80, %c0_81] : memref<16x32xf32, #tpu.memory_space<vmem>>, vector<16x32xf32>
    %c164 = arith.constant 164 : index
    %c0_82 = arith.constant 0 : index
    %81 = vector.load %arg2[%c164, %c0_82] : memref<184x128xf32, #tpu.memory_space<vmem>>, vector<16x32xf32>
    %82 = arith.addf %80, %81 : vector<16x32xf32>
    %83 = tpu.iota {dimensions = array<i32: 1>} : vector<1x16xi32>
    %cst = arith.constant 0.000000e+00 : f32
    %84 = vector.broadcast %cst : f32 to vector<1x16xf32>
    %c0_83 = arith.constant 0 : index
    %c0_84 = arith.constant 0 : index
    %85 = memref.load %arg1[%c0_83, %c0_84] : memref<2x8xi32, #tpu.memory_space<smem>>
    %86 = arith.sitofp %85 : i32 to f32
    %cst_85 = arith.constant 1.000000e+00 : f32
    %87 = arith.subf %86, %cst_85 : f32
    %cst_86 = arith.constant 1.000000e+09 : f32
    %88 = arith.mulf %87, %cst_86 : f32
    %c0_i32 = arith.constant 0 : i32
    %89 = vector.broadcast %c0_i32 : i32 to vector<1x16xi32>
    %90 = arith.cmpi eq, %83, %89 : vector<1x16xi32>
    %91 = vector.broadcast %88 : f32 to vector<1x16xf32>
    %92 = arith.select %90, %91, %84 : vector<1x16xi1>, vector<1x16xf32>
    %c0_87 = arith.constant 0 : index
    %c1_88 = arith.constant 1 : index
    %93 = memref.load %arg1[%c0_87, %c1_88] : memref<2x8xi32, #tpu.memory_space<smem>>
    %94 = arith.sitofp %93 : i32 to f32
    %cst_89 = arith.constant 1.000000e+00 : f32
    %95 = arith.subf %94, %cst_89 : f32
    %cst_90 = arith.constant 1.000000e+09 : f32
    %96 = arith.mulf %95, %cst_90 : f32
    %c1_i32 = arith.constant 1 : i32
    %97 = vector.broadcast %c1_i32 : i32 to vector<1x16xi32>
    %98 = arith.cmpi eq, %83, %97 : vector<1x16xi32>
    %99 = vector.broadcast %96 : f32 to vector<1x16xf32>
    %100 = arith.select %98, %99, %92 : vector<1x16xi1>, vector<1x16xf32>
    %c0_91 = arith.constant 0 : index
    %c2_92 = arith.constant 2 : index
    %101 = memref.load %arg1[%c0_91, %c2_92] : memref<2x8xi32, #tpu.memory_space<smem>>
    %102 = arith.sitofp %101 : i32 to f32
    %cst_93 = arith.constant 1.000000e+00 : f32
    %103 = arith.subf %102, %cst_93 : f32
    %cst_94 = arith.constant 1.000000e+09 : f32
    %104 = arith.mulf %103, %cst_94 : f32
    %c2_i32 = arith.constant 2 : i32
    %105 = vector.broadcast %c2_i32 : i32 to vector<1x16xi32>
    %106 = arith.cmpi eq, %83, %105 : vector<1x16xi32>
    %107 = vector.broadcast %104 : f32 to vector<1x16xf32>
    %108 = arith.select %106, %107, %100 : vector<1x16xi1>, vector<1x16xf32>
    %c0_95 = arith.constant 0 : index
    %c3_96 = arith.constant 3 : index
    %109 = memref.load %arg1[%c0_95, %c3_96] : memref<2x8xi32, #tpu.memory_space<smem>>
    %110 = arith.sitofp %109 : i32 to f32
    %cst_97 = arith.constant 1.000000e+00 : f32
    %111 = arith.subf %110, %cst_97 : f32
    %cst_98 = arith.constant 1.000000e+09 : f32
    %112 = arith.mulf %111, %cst_98 : f32
    %c3_i32 = arith.constant 3 : i32
    %113 = vector.broadcast %c3_i32 : i32 to vector<1x16xi32>
    %114 = arith.cmpi eq, %83, %113 : vector<1x16xi32>
    %115 = vector.broadcast %112 : f32 to vector<1x16xf32>
    %116 = arith.select %114, %115, %108 : vector<1x16xi1>, vector<1x16xf32>
    %c0_99 = arith.constant 0 : index
    %c4_100 = arith.constant 4 : index
    %117 = memref.load %arg1[%c0_99, %c4_100] : memref<2x8xi32, #tpu.memory_space<smem>>
    %118 = arith.sitofp %117 : i32 to f32
    %cst_101 = arith.constant 1.000000e+00 : f32
    %119 = arith.subf %118, %cst_101 : f32
    %cst_102 = arith.constant 1.000000e+09 : f32
    %120 = arith.mulf %119, %cst_102 : f32
    %c4_i32 = arith.constant 4 : i32
    %121 = vector.broadcast %c4_i32 : i32 to vector<1x16xi32>
    %122 = arith.cmpi eq, %83, %121 : vector<1x16xi32>
    %123 = vector.broadcast %120 : f32 to vector<1x16xf32>
    %124 = arith.select %122, %123, %116 : vector<1x16xi1>, vector<1x16xf32>
    %c0_103 = arith.constant 0 : index
    %c5_104 = arith.constant 5 : index
    %125 = memref.load %arg1[%c0_103, %c5_104] : memref<2x8xi32, #tpu.memory_space<smem>>
    %126 = arith.sitofp %125 : i32 to f32
    %cst_105 = arith.constant 1.000000e+00 : f32
    %127 = arith.subf %126, %cst_105 : f32
    %cst_106 = arith.constant 1.000000e+09 : f32
    %128 = arith.mulf %127, %cst_106 : f32
    %c5_i32 = arith.constant 5 : i32
    %129 = vector.broadcast %c5_i32 : i32 to vector<1x16xi32>
    %130 = arith.cmpi eq, %83, %129 : vector<1x16xi32>
    %131 = vector.broadcast %128 : f32 to vector<1x16xf32>
    %132 = arith.select %130, %131, %124 : vector<1x16xi1>, vector<1x16xf32>
    %c0_107 = arith.constant 0 : index
    %c6_108 = arith.constant 6 : index
    %133 = memref.load %arg1[%c0_107, %c6_108] : memref<2x8xi32, #tpu.memory_space<smem>>
    %134 = arith.sitofp %133 : i32 to f32
    %cst_109 = arith.constant 1.000000e+00 : f32
    %135 = arith.subf %134, %cst_109 : f32
    %cst_110 = arith.constant 1.000000e+09 : f32
    %136 = arith.mulf %135, %cst_110 : f32
    %c6_i32 = arith.constant 6 : i32
    %137 = vector.broadcast %c6_i32 : i32 to vector<1x16xi32>
    %138 = arith.cmpi eq, %83, %137 : vector<1x16xi32>
    %139 = vector.broadcast %136 : f32 to vector<1x16xf32>
    %140 = arith.select %138, %139, %132 : vector<1x16xi1>, vector<1x16xf32>
    %c0_111 = arith.constant 0 : index
    %c7_112 = arith.constant 7 : index
    %141 = memref.load %arg1[%c0_111, %c7_112] : memref<2x8xi32, #tpu.memory_space<smem>>
    %142 = arith.sitofp %141 : i32 to f32
    %cst_113 = arith.constant 1.000000e+00 : f32
    %143 = arith.subf %142, %cst_113 : f32
    %cst_114 = arith.constant 1.000000e+09 : f32
    %144 = arith.mulf %143, %cst_114 : f32
    %c7_i32 = arith.constant 7 : i32
    %145 = vector.broadcast %c7_i32 : i32 to vector<1x16xi32>
    %146 = arith.cmpi eq, %83, %145 : vector<1x16xi32>
    %147 = vector.broadcast %144 : f32 to vector<1x16xf32>
    %148 = arith.select %146, %147, %140 : vector<1x16xi1>, vector<1x16xf32>
    %c1_115 = arith.constant 1 : index
    %c0_116 = arith.constant 0 : index
    %149 = memref.load %arg1[%c1_115, %c0_116] : memref<2x8xi32, #tpu.memory_space<smem>>
    %150 = arith.sitofp %149 : i32 to f32
    %cst_117 = arith.constant 1.000000e+00 : f32
    %151 = arith.subf %150, %cst_117 : f32
    %cst_118 = arith.constant 1.000000e+09 : f32
    %152 = arith.mulf %151, %cst_118 : f32
    %c8_i32 = arith.constant 8 : i32
    %153 = vector.broadcast %c8_i32 : i32 to vector<1x16xi32>
    %154 = arith.cmpi eq, %83, %153 : vector<1x16xi32>
    %155 = vector.broadcast %152 : f32 to vector<1x16xf32>
    %156 = arith.select %154, %155, %148 : vector<1x16xi1>, vector<1x16xf32>
    %c1_119 = arith.constant 1 : index
    %c1_120 = arith.constant 1 : index
    %157 = memref.load %arg1[%c1_119, %c1_120] : memref<2x8xi32, #tpu.memory_space<smem>>
    %158 = arith.sitofp %157 : i32 to f32
    %cst_121 = arith.constant 1.000000e+00 : f32
    %159 = arith.subf %158, %cst_121 : f32
    %cst_122 = arith.constant 1.000000e+09 : f32
    %160 = arith.mulf %159, %cst_122 : f32
    %c9_i32 = arith.constant 9 : i32
    %161 = vector.broadcast %c9_i32 : i32 to vector<1x16xi32>
    %162 = arith.cmpi eq, %83, %161 : vector<1x16xi32>
    %163 = vector.broadcast %160 : f32 to vector<1x16xf32>
    %164 = arith.select %162, %163, %156 : vector<1x16xi1>, vector<1x16xf32>
    %c1_123 = arith.constant 1 : index
    %c2_124 = arith.constant 2 : index
    %165 = memref.load %arg1[%c1_123, %c2_124] : memref<2x8xi32, #tpu.memory_space<smem>>
    %166 = arith.sitofp %165 : i32 to f32
    %cst_125 = arith.constant 1.000000e+00 : f32
    %167 = arith.subf %166, %cst_125 : f32
    %cst_126 = arith.constant 1.000000e+09 : f32
    %168 = arith.mulf %167, %cst_126 : f32
    %c10_i32 = arith.constant 10 : i32
    %169 = vector.broadcast %c10_i32 : i32 to vector<1x16xi32>
    %170 = arith.cmpi eq, %83, %169 : vector<1x16xi32>
    %171 = vector.broadcast %168 : f32 to vector<1x16xf32>
    %172 = arith.select %170, %171, %164 : vector<1x16xi1>, vector<1x16xf32>
    %c1_127 = arith.constant 1 : index
    %c3_128 = arith.constant 3 : index
    %173 = memref.load %arg1[%c1_127, %c3_128] : memref<2x8xi32, #tpu.memory_space<smem>>
    %174 = arith.sitofp %173 : i32 to f32
    %cst_129 = arith.constant 1.000000e+00 : f32
    %175 = arith.subf %174, %cst_129 : f32
    %cst_130 = arith.constant 1.000000e+09 : f32
    %176 = arith.mulf %175, %cst_130 : f32
    %c11_i32 = arith.constant 11 : i32
    %177 = vector.broadcast %c11_i32 : i32 to vector<1x16xi32>
    %178 = arith.cmpi eq, %83, %177 : vector<1x16xi32>
    %179 = vector.broadcast %176 : f32 to vector<1x16xf32>
    %180 = arith.select %178, %179, %172 : vector<1x16xi1>, vector<1x16xf32>
    %c1_131 = arith.constant 1 : index
    %c4_132 = arith.constant 4 : index
    %181 = memref.load %arg1[%c1_131, %c4_132] : memref<2x8xi32, #tpu.memory_space<smem>>
    %182 = arith.sitofp %181 : i32 to f32
    %cst_133 = arith.constant 1.000000e+00 : f32
    %183 = arith.subf %182, %cst_133 : f32
    %cst_134 = arith.constant 1.000000e+09 : f32
    %184 = arith.mulf %183, %cst_134 : f32
    %c12_i32 = arith.constant 12 : i32
    %185 = vector.broadcast %c12_i32 : i32 to vector<1x16xi32>
    %186 = arith.cmpi eq, %83, %185 : vector<1x16xi32>
    %187 = vector.broadcast %184 : f32 to vector<1x16xf32>
    %188 = arith.select %186, %187, %180 : vector<1x16xi1>, vector<1x16xf32>
    %c1_135 = arith.constant 1 : index
    %c5_136 = arith.constant 5 : index
    %189 = memref.load %arg1[%c1_135, %c5_136] : memref<2x8xi32, #tpu.memory_space<smem>>
    %190 = arith.sitofp %189 : i32 to f32
    %cst_137 = arith.constant 1.000000e+00 : f32
    %191 = arith.subf %190, %cst_137 : f32
    %cst_138 = arith.constant 1.000000e+09 : f32
    %192 = arith.mulf %191, %cst_138 : f32
    %c13_i32 = arith.constant 13 : i32
    %193 = vector.broadcast %c13_i32 : i32 to vector<1x16xi32>
    %194 = arith.cmpi eq, %83, %193 : vector<1x16xi32>
    %195 = vector.broadcast %192 : f32 to vector<1x16xf32>
    %196 = arith.select %194, %195, %188 : vector<1x16xi1>, vector<1x16xf32>
    %c1_139 = arith.constant 1 : index
    %c6_140 = arith.constant 6 : index
    %197 = memref.load %arg1[%c1_139, %c6_140] : memref<2x8xi32, #tpu.memory_space<smem>>
    %198 = arith.sitofp %197 : i32 to f32
    %cst_141 = arith.constant 1.000000e+00 : f32
    %199 = arith.subf %198, %cst_141 : f32
    %cst_142 = arith.constant 1.000000e+09 : f32
    %200 = arith.mulf %199, %cst_142 : f32
    %c14_i32 = arith.constant 14 : i32
    %201 = vector.broadcast %c14_i32 : i32 to vector<1x16xi32>
    %202 = arith.cmpi eq, %83, %201 : vector<1x16xi32>
    %203 = vector.broadcast %200 : f32 to vector<1x16xf32>
    %204 = arith.select %202, %203, %196 : vector<1x16xi1>, vector<1x16xf32>
    %c1_143 = arith.constant 1 : index
    %c7_144 = arith.constant 7 : index
    %205 = memref.load %arg1[%c1_143, %c7_144] : memref<2x8xi32, #tpu.memory_space<smem>>
    %206 = arith.sitofp %205 : i32 to f32
    %cst_145 = arith.constant 1.000000e+00 : f32
    %207 = arith.subf %206, %cst_145 : f32
    %cst_146 = arith.constant 1.000000e+09 : f32
    %208 = arith.mulf %207, %cst_146 : f32
    %c15_i32 = arith.constant 15 : i32
    %209 = vector.broadcast %c15_i32 : i32 to vector<1x16xi32>
    %210 = arith.cmpi eq, %83, %209 : vector<1x16xi32>
    %211 = vector.broadcast %208 : f32 to vector<1x16xf32>
    %212 = arith.select %210, %211, %204 : vector<1x16xi1>, vector<1x16xf32>
    %c164_147 = arith.constant 164 : index
    %c32 = arith.constant 32 : index
    %213 = vector.load %arg2[%c164_147, %c32] : memref<184x128xf32, #tpu.memory_space<vmem>>, vector<16x16xf32>
    %214 = vector.broadcast %212 : vector<1x16xf32> to vector<16x16xf32>
    %215 = arith.addf %213, %214 : vector<16x16xf32>
    %c0_148 = arith.constant 0 : index
    %c0_149 = arith.constant 0 : index
    %216 = vector.load %arg2[%c0_148, %c0_149] : memref<184x128xf32, #tpu.memory_space<vmem>>, vector<32x96xf32>
    %cst_150 = arith.constant dense<0.000000e+00> : vector<16x96xf32>
    %217 = tpu.matmul %82, %216, %cst_150 {dimension_numbers = #tpu.dot_dimension_numbers<[1], [0], [0], [1], [0, 0, 1, 1], [], []>} : vector<16x32xf32>, vector<32x96xf32>, vector<16x96xf32> -> vector<16x96xf32>
    %c160 = arith.constant 160 : index
    %c0_151 = arith.constant 0 : index
    %218 = vector.load %arg2[%c160, %c0_151] : memref<184x128xf32, #tpu.memory_space<vmem>>, vector<1x96xf32>
    %219 = vector.broadcast %218 : vector<1x96xf32> to vector<16x96xf32>
    %220 = arith.addf %217, %219 : vector<16x96xf32>
    %221 = vector.extract_strided_slice %220 {offsets = [0, 0], sizes = [16, 16], strides = [1, 1]} : vector<16x96xf32> to vector<16x16xf32>
    %222 = vector.extract_strided_slice %220 {offsets = [0, 32], sizes = [16, 16], strides = [1, 1]} : vector<16x96xf32> to vector<16x16xf32>
    %223 = vector.extract_strided_slice %220 {offsets = [0, 64], sizes = [16, 16], strides = [1, 1]} : vector<16x96xf32> to vector<16x16xf32>
    %cst_152 = arith.constant dense<0.000000e+00> : vector<16x16xf32>
    %224 = tpu.matmul %221, %222, %cst_152 {dimension_numbers = #tpu.dot_dimension_numbers<[1], [1], [0], [0], [0, 0, 1, 0], [], []>} : vector<16x16xf32>, vector<16x16xf32>, vector<16x16xf32> -> vector<16x16xf32>
    %225 = arith.addf %224, %215 : vector<16x16xf32>
    %cst_153 = arith.constant dense<0xFF800000> : vector<16xf32>
    %226 = vector.multi_reduction <maximumf>, %225, %cst_153 [1] : vector<16x16xf32> to vector<16xf32>
    %227 = vector.shape_cast %226 : vector<16xf32> to vector<16x1xf32>
    %228 = vector.broadcast %227 : vector<16x1xf32> to vector<16x16xf32>
    %229 = arith.subf %225, %228 : vector<16x16xf32>
    %230 = math.exp %229 : vector<16x16xf32>
    %cst_154 = arith.constant dense<0.000000e+00> : vector<16xf32>
    %231 = vector.multi_reduction <add>, %230, %cst_154 [1] : vector<16x16xf32> to vector<16xf32>
    %232 = vector.shape_cast %231 : vector<16xf32> to vector<16x1xf32>
    %233 = vector.broadcast %232 : vector<16x1xf32> to vector<16x16xf32>
    %234 = arith.divf %230, %233 : vector<16x16xf32>
    %cst_155 = arith.constant dense<0.000000e+00> : vector<16x16xf32>
    %235 = tpu.matmul %234, %223, %cst_155 {dimension_numbers = #tpu.dot_dimension_numbers<[1], [0], [0], [1], [0, 0, 1, 1], [], []>} : vector<16x16xf32>, vector<16x16xf32>, vector<16x16xf32> -> vector<16x16xf32>
    %236 = vector.extract_strided_slice %220 {offsets = [0, 16], sizes = [16, 16], strides = [1, 1]} : vector<16x96xf32> to vector<16x16xf32>
    %237 = vector.extract_strided_slice %220 {offsets = [0, 48], sizes = [16, 16], strides = [1, 1]} : vector<16x96xf32> to vector<16x16xf32>
    %238 = vector.extract_strided_slice %220 {offsets = [0, 80], sizes = [16, 16], strides = [1, 1]} : vector<16x96xf32> to vector<16x16xf32>
    %cst_156 = arith.constant dense<0.000000e+00> : vector<16x16xf32>
    %239 = tpu.matmul %236, %237, %cst_156 {dimension_numbers = #tpu.dot_dimension_numbers<[1], [1], [0], [0], [0, 0, 1, 0], [], []>} : vector<16x16xf32>, vector<16x16xf32>, vector<16x16xf32> -> vector<16x16xf32>
    %240 = arith.addf %239, %215 : vector<16x16xf32>
    %cst_157 = arith.constant dense<0xFF800000> : vector<16xf32>
    %241 = vector.multi_reduction <maximumf>, %240, %cst_157 [1] : vector<16x16xf32> to vector<16xf32>
    %242 = vector.shape_cast %241 : vector<16xf32> to vector<16x1xf32>
    %243 = vector.broadcast %242 : vector<16x1xf32> to vector<16x16xf32>
    %244 = arith.subf %240, %243 : vector<16x16xf32>
    %245 = math.exp %244 : vector<16x16xf32>
    %cst_158 = arith.constant dense<0.000000e+00> : vector<16xf32>
    %246 = vector.multi_reduction <add>, %245, %cst_158 [1] : vector<16x16xf32> to vector<16xf32>
    %247 = vector.shape_cast %246 : vector<16xf32> to vector<16x1xf32>
    %248 = vector.broadcast %247 : vector<16x1xf32> to vector<16x16xf32>
    %249 = arith.divf %245, %248 : vector<16x16xf32>
    %cst_159 = arith.constant dense<0.000000e+00> : vector<16x16xf32>
    %250 = tpu.matmul %249, %238, %cst_159 {dimension_numbers = #tpu.dot_dimension_numbers<[1], [0], [0], [1], [0, 0, 1, 1], [], []>} : vector<16x16xf32>, vector<16x16xf32>, vector<16x16xf32> -> vector<16x16xf32>
    %251 = tpu.concatenate %235, %250 in 1 : vector<16x16xf32>, vector<16x16xf32> -> vector<16x32xf32>
    %c0_160 = arith.constant 0 : index
    %c96 = arith.constant 96 : index
    %252 = vector.load %arg2[%c0_160, %c96] : memref<184x128xf32, #tpu.memory_space<vmem>>, vector<32x32xf32>
    %cst_161 = arith.constant dense<0.000000e+00> : vector<16x32xf32>
    %253 = tpu.matmul %251, %252, %cst_161 {dimension_numbers = #tpu.dot_dimension_numbers<[1], [0], [0], [1], [0, 0, 1, 1], [], []>} : vector<16x32xf32>, vector<32x32xf32>, vector<16x32xf32> -> vector<16x32xf32>
    %c160_162 = arith.constant 160 : index
    %c96_163 = arith.constant 96 : index
    %254 = vector.load %arg2[%c160_162, %c96_163] : memref<184x128xf32, #tpu.memory_space<vmem>>, vector<1x32xf32>
    %255 = vector.broadcast %254 : vector<1x32xf32> to vector<16x32xf32>
    %256 = arith.addf %253, %255 : vector<16x32xf32>
    %257 = arith.addf %82, %256 : vector<16x32xf32>
    %c161 = arith.constant 161 : index
    %c64 = arith.constant 64 : index
    %258 = vector.load %arg2[%c161, %c64] : memref<184x128xf32, #tpu.memory_space<vmem>>, vector<1x32xf32>
    %c161_164 = arith.constant 161 : index
    %c96_165 = arith.constant 96 : index
    %259 = vector.load %arg2[%c161_164, %c96_165] : memref<184x128xf32, #tpu.memory_space<vmem>>, vector<1x32xf32>
    %cst_166 = arith.constant dense<0.000000e+00> : vector<16xf32>
    %260 = vector.multi_reduction <add>, %257, %cst_166 [1] : vector<16x32xf32> to vector<16xf32>
    %261 = vector.shape_cast %260 : vector<16xf32> to vector<16x1xf32>
    %cst_167 = arith.constant 3.200000e+01 : f32
    %262 = vector.broadcast %cst_167 : f32 to vector<16x1xf32>
    %263 = arith.divf %261, %262 : vector<16x1xf32>
    %264 = vector.broadcast %263 : vector<16x1xf32> to vector<16x32xf32>
    %265 = arith.subf %257, %264 : vector<16x32xf32>
    %266 = arith.mulf %265, %265 : vector<16x32xf32>
    %cst_168 = arith.constant dense<0.000000e+00> : vector<16xf32>
    %267 = vector.multi_reduction <add>, %266, %cst_168 [1] : vector<16x32xf32> to vector<16xf32>
    %268 = vector.shape_cast %267 : vector<16xf32> to vector<16x1xf32>
    %cst_169 = arith.constant 3.200000e+01 : f32
    %269 = vector.broadcast %cst_169 : f32 to vector<16x1xf32>
    %270 = arith.divf %268, %269 : vector<16x1xf32>
    %271 = vector.broadcast %263 : vector<16x1xf32> to vector<16x32xf32>
    %272 = arith.subf %257, %271 : vector<16x32xf32>
    %cst_170 = arith.constant 9.99999996E-13 : f32
    %273 = vector.broadcast %cst_170 : f32 to vector<16x1xf32>
    %274 = arith.addf %270, %273 : vector<16x1xf32>
    %275 = math.rsqrt %274 : vector<16x1xf32>
    %276 = vector.broadcast %275 : vector<16x1xf32> to vector<16x32xf32>
    %277 = arith.mulf %272, %276 : vector<16x32xf32>
    %278 = vector.broadcast %258 : vector<1x32xf32> to vector<16x32xf32>
    %279 = arith.mulf %277, %278 : vector<16x32xf32>
    %280 = vector.broadcast %259 : vector<1x32xf32> to vector<16x32xf32>
    %281 = arith.addf %279, %280 : vector<16x32xf32>
    %c0_171 = arith.constant 0 : index
    %c0_172 = arith.constant 0 : index
    %282 = vector.load %arg5[%c0_171, %c0_172] : memref<16x32xf32, #tpu.memory_space<vmem>>, vector<16x32xf32>
    tpu.vector_store %arg5[%c0_171, %c0_172], %281 {strides = array<i32>} : memref<16x32xf32, #tpu.memory_space<vmem>>, vector<16x32xf32>,
    %c0_173 = arith.constant 0 : index
    %c0_174 = arith.constant 0 : index
    %283 = tpu.strided_load %arg5[%c0_173, %c0_174] {strides = array<i32: 8, 1>} : memref<16x32xf32, #tpu.memory_space<vmem>>, vector<2x32xf32>
    %c32_175 = arith.constant 32 : index
    %c0_176 = arith.constant 0 : index
    %284 = vector.load %arg2[%c32_175, %c0_176] : memref<184x128xf32, #tpu.memory_space<vmem>>, vector<32x64xf32>
    %cst_177 = arith.constant dense<0.000000e+00> : vector<2x64xf32>
    %285 = tpu.matmul %283, %284, %cst_177 {dimension_numbers = #tpu.dot_dimension_numbers<[1], [0], [0], [1], [0, 0, 1, 1], [], []>} : vector<2x32xf32>, vector<32x64xf32>, vector<2x64xf32> -> vector<2x64xf32>
    %c161_178 = arith.constant 161 : index
    %c0_179 = arith.constant 0 : index
    %286 = vector.load %arg2[%c161_178, %c0_179] : memref<184x128xf32, #tpu.memory_space<vmem>>, vector<1x64xf32>
    %287 = vector.broadcast %286 : vector<1x64xf32> to vector<2x64xf32>
    %288 = arith.addf %285, %287 : vector<2x64xf32>
    %289 = arith.mulf %288, %288 : vector<2x64xf32>
    %290 = arith.mulf %288, %289 : vector<2x64xf32>
    %cst_180 = arith.constant 4.471500e-02 : f32
    %291 = vector.broadcast %cst_180 : f32 to vector<2x64xf32>
    %292 = arith.mulf %291, %290 : vector<2x64xf32>
    %293 = arith.addf %288, %292 : vector<2x64xf32>
    %cst_181 = arith.constant 0.797884583 : f32
    %294 = vector.broadcast %cst_181 : f32 to vector<2x64xf32>
    %295 = arith.mulf %294, %293 : vector<2x64xf32>
    %296 = math.tanh %295 : vector<2x64xf32>
    %cst_182 = arith.constant 1.000000e+00 : f32
    %297 = vector.broadcast %cst_182 : f32 to vector<2x64xf32>
    %298 = arith.addf %297, %296 : vector<2x64xf32>
    %cst_183 = arith.constant 5.000000e-01 : f32
    %299 = vector.broadcast %cst_183 : f32 to vector<2x64xf32>
    %300 = arith.mulf %299, %298 : vector<2x64xf32>
    %301 = arith.mulf %288, %300 : vector<2x64xf32>
    %c64_184 = arith.constant 64 : index
    %c0_185 = arith.constant 0 : index
    %302 = vector.load %arg2[%c64_184, %c0_185] : memref<184x128xf32, #tpu.memory_space<vmem>>, vector<64x32xf32>
    %cst_186 = arith.constant dense<0.000000e+00> : vector<2x32xf32>
    %303 = tpu.matmul %301, %302, %cst_186 {dimension_numbers = #tpu.dot_dimension_numbers<[1], [0], [0], [1], [0, 0, 1, 1], [], []>} : vector<2x64xf32>, vector<64x32xf32>, vector<2x32xf32> -> vector<2x32xf32>
    %c162 = arith.constant 162 : index
    %c0_187 = arith.constant 0 : index
    %304 = vector.load %arg2[%c162, %c0_187] : memref<184x128xf32, #tpu.memory_space<vmem>>, vector<1x32xf32>
    %305 = vector.broadcast %304 : vector<1x32xf32> to vector<2x32xf32>
    %306 = arith.addf %303, %305 : vector<2x32xf32>
    %307 = arith.addf %283, %306 : vector<2x32xf32>
    %c162_188 = arith.constant 162 : index
    %c32_189 = arith.constant 32 : index
    %308 = vector.load %arg2[%c162_188, %c32_189] : memref<184x128xf32, #tpu.memory_space<vmem>>, vector<1x32xf32>
    %c162_190 = arith.constant 162 : index
    %c64_191 = arith.constant 64 : index
    %309 = vector.load %arg2[%c162_190, %c64_191] : memref<184x128xf32, #tpu.memory_space<vmem>>, vector<1x32xf32>
    %cst_192 = arith.constant dense<0.000000e+00> : vector<2xf32>
    %310 = vector.multi_reduction <add>, %307, %cst_192 [1] : vector<2x32xf32> to vector<2xf32>
    %311 = vector.shape_cast %310 : vector<2xf32> to vector<2x1xf32>
    %cst_193 = arith.constant 3.200000e+01 : f32
    %312 = vector.broadcast %cst_193 : f32 to vector<2x1xf32>
    %313 = arith.divf %311, %312 : vector<2x1xf32>
    %314 = vector.broadcast %313 : vector<2x1xf32> to vector<2x32xf32>
    %315 = arith.subf %307, %314 : vector<2x32xf32>
    %316 = arith.mulf %315, %315 : vector<2x32xf32>
    %cst_194 = arith.constant dense<0.000000e+00> : vector<2xf32>
    %317 = vector.multi_reduction <add>, %316, %cst_194 [1] : vector<2x32xf32> to vector<2xf32>
    %318 = vector.shape_cast %317 : vector<2xf32> to vector<2x1xf32>
    %cst_195 = arith.constant 3.200000e+01 : f32
    %319 = vector.broadcast %cst_195 : f32 to vector<2x1xf32>
    %320 = arith.divf %318, %319 : vector<2x1xf32>
    %321 = vector.broadcast %313 : vector<2x1xf32> to vector<2x32xf32>
    %322 = arith.subf %307, %321 : vector<2x32xf32>
    %cst_196 = arith.constant 9.99999996E-13 : f32
    %323 = vector.broadcast %cst_196 : f32 to vector<2x1xf32>
    %324 = arith.addf %320, %323 : vector<2x1xf32>
    %325 = math.rsqrt %324 : vector<2x1xf32>
    %326 = vector.broadcast %325 : vector<2x1xf32> to vector<2x32xf32>
    %327 = arith.mulf %322, %326 : vector<2x32xf32>
    %328 = vector.broadcast %308 : vector<1x32xf32> to vector<2x32xf32>
    %329 = arith.mulf %327, %328 : vector<2x32xf32>
    %330 = vector.broadcast %309 : vector<1x32xf32> to vector<2x32xf32>
    %331 = arith.addf %329, %330 : vector<2x32xf32>
    %c128 = arith.constant 128 : index
    %c0_197 = arith.constant 0 : index
    %332 = vector.load %arg2[%c128, %c0_197] : memref<184x128xf32, #tpu.memory_space<vmem>>, vector<32x128xf32>
    %cst_198 = arith.constant dense<0.000000e+00> : vector<2x128xf32>
    %333 = tpu.matmul %331, %332, %cst_198 {dimension_numbers = #tpu.dot_dimension_numbers<[1], [0], [0], [1], [0, 0, 1, 1], [], []>} : vector<2x32xf32>, vector<32x128xf32>, vector<2x128xf32> -> vector<2x128xf32>
    %c163 = arith.constant 163 : index
    %c0_199 = arith.constant 0 : index
    %334 = vector.load %arg2[%c163, %c0_199] : memref<184x128xf32, #tpu.memory_space<vmem>>, vector<1x128xf32>
    %335 = vector.broadcast %334 : vector<1x128xf32> to vector<2x128xf32>
    %336 = arith.addf %333, %335 : vector<2x128xf32>
    %c0_200 = arith.constant 0 : index
    %c0_201 = arith.constant 0 : index
    %337 = vector.load %arg4[%c0_200, %c0_201] : memref<2x128xf32, #tpu.memory_space<vmem>>, vector<2x128xf32>
    tpu.vector_store %arg4[%c0_200, %c0_201], %336 {strides = array<i32>} : memref<2x128xf32, #tpu.memory_space<vmem>>, vector<2x128xf32>,
    return
  }
}

</mosaic_0001>

<llo_original>
// kernel: nli_forward_padded.1
$region0: #{nli_forward_padded.1}
  #allocation0 [shape = 'u32[]', space=smem, size = 0x4, offset = 0x4, fixed_abs, tag = 'smem constant byte address 0x4 - core index']
  #allocation1 [shape = 'u32[144,128]{1,0:T(1,128)}', space=vmem, size = 0x12000, scoped, tag = 'internal scratch']
  #allocation2 [shape = 'f32[16,32]{1,0:T(8,128)}', space=vmem, size = 0x2000, scoped, tag = 'scratch operand']
  %s0 = inlined_call_operand.vmem [shape: s32[2,8], index: 0, kind: input, shape index: {}]
  %s1 = inlined_call_operand.vmem [shape: s32[2,8], index: 1, kind: input, shape index: {}]
  %s2 = inlined_call_operand.hbm [shape: f32[184,128], index: 2, kind: input, shape index: {}]
  %s3 = inlined_call_operand.vmem [shape: f32[100,1,32], index: 3, kind: input, shape index: {}]
  %s4 = inlined_call_operand.hbm [shape: f32[2,128], index: 4, kind: output, shape index: {}]
  %s5 = sld [smem:[#allocation0]]
  $region38: #{nli_forward_padded.1} parent=0
    _
  %s7 = ssub.s32 1, %s5
  %s8 = scalar_select 0, %s7, %s5
  $region1: #{nli_forward_padded.1} parent=0
    #allocation3 [shape = 'u8[1024]{0}', space=smem, size = 0x400, scoped, tag = 'input window, operand 0, single buffered']
    #allocation4 [shape = 's32[1]{0}', space=sflag, size = 0x4, scoped, tag = 'scoped memory for nli_forward_padded.1']
    #allocation5 [shape = 's32[1]{0}', space=sflag, size = 0x4, scoped, tag = 'scoped memory for nli_forward_padded.1']
    #allocation6 [shape = 's32[1]{0}', space=sflag, size = 0x4, scoped, tag = 'scoped memory for nli_forward_padded.1']
    #allocation7 [shape = 'u8[1024]{0}', space=smem, size = 0x400, scoped, tag = 'input window, operand 1, single buffered']
    #allocation8 [shape = 's32[1]{0}', space=sflag, size = 0x4, scoped, tag = 'scoped memory for nli_forward_padded.1']
    #allocation9 [shape = 'u8[94208]{0}', space=vmem, size = 0x17000, scoped, tag = 'input window, operand 2, single buffered']
    #allocation10 [shape = 'u8[1024]{0}', space=vmem, size = 0x400, scoped, tag = 'output window, operand 0, single buffered']
    %9 = vsyncpa [#allocation6], 0
    %10 = vsyncpa [#allocation8], 0
    %11 = vsyncpa [#allocation4], 0
    %12 = vsyncpa [#allocation5], 0
    // Predicated region
    $region2: #{nli_forward_padded.1} parent=1 // pred_check
      _
    $region3: #{nli_forward_padded.1} parent=1 // pred_check_branch
      %14 = sbr.rel (0) target = $region5
    $region4: #{nli_forward_padded.1} parent=1 // pred_region
      %s16 = ssub.s32 32, 32
      %17 = vsyncadd [#allocation6], %s16
      %s19 = sshll.u32 %s0, 4
      %s20 = int_to_ptr.vmem [resolvable:$true] %s19
      %22 = dma.vmem_to_smem %s20, 32, [#allocation3], [#allocation6]
    $region5: #{nli_forward_padded.1} parent=1 // pred_fallthru
      _
    // Predicated region
    $region6: #{nli_forward_padded.1} parent=1 // pred_check
      _
    $region7: #{nli_forward_padded.1} parent=1 // pred_check_branch
      %24 = sbr.rel (0) target = $region9
    $region8: #{nli_forward_padded.1} parent=1 // pred_region
      %s26 = ssub.s32 32, 32
      %27 = vsyncadd [#allocation8], %s26
      %s29 = sshll.u32 %s1, 4
      %s30 = int_to_ptr.vmem [resolvable:$true] %s29
      %32 = dma.vmem_to_smem %s30, 32, [#allocation7], [#allocation8]
    $region9: #{nli_forward_padded.1} parent=1 // pred_fallthru
      _
    // Predicated region
    $region10: #{nli_forward_padded.1} parent=1 // pred_check
      _
    $region11: #{nli_forward_padded.1} parent=1 // pred_check_branch
      %34 = sbr.rel (0) target = $region13
    $region12: #{nli_forward_padded.1} parent=1 // pred_region
      %s36 = ssub.s32 2944, 2944
      %37 = vsyncadd [#allocation4], %s36
      %s38 = sshll.u32 [#allocation9], 4
      %s39 = int_to_ptr.vmem [resolvable:$true] %s38
      %44 = dma.hbm_to_vmem [thread:$0]  %s2, 2944, %s39, [#allocation4], 128, 128, 8
    $region13: #{nli_forward_padded.1} parent=1 // pred_fallthru
      _
    // Predicated region
    $region14: #{nli_forward_padded.1} parent=1 // pred_check
      _
    $region15: #{nli_forward_padded.1} parent=1 // pred_check_branch
      %46 = sbr.rel (0) target = $region17
    $region16: #{nli_forward_padded.1} parent=1 // pred_region
      _
    $region17: #{nli_forward_padded.1} parent=1 // pred_fallthru
      _
    // Predicated region
    $region18: #{nli_forward_padded.1} parent=1 // pred_check
      _
    $region19: #{nli_forward_padded.1} parent=1 // pred_check_branch
      %48 = sbr.rel (0) target = $region21
    $region20: #{nli_forward_padded.1} parent=1 // pred_region
      %49 = dma.done [#allocation6], 32
    $region21: #{nli_forward_padded.1} parent=1 // pred_fallthru
      _
    // Predicated region
    $region22: #{nli_forward_padded.1} parent=1 // pred_check
      _
    $region23: #{nli_forward_padded.1} parent=1 // pred_check_branch
      %51 = sbr.rel (0) target = $region25
    $region24: #{nli_forward_padded.1} parent=1 // pred_region
      %52 = dma.done [#allocation8], 32
    $region25: #{nli_forward_padded.1} parent=1 // pred_fallthru
      _
    // Predicated region
    $region26: #{nli_forward_padded.1} parent=1 // pred_check
      _
    $region27: #{nli_forward_padded.1} parent=1 // pred_check_branch
      %54 = sbr.rel (0) target = $region29
    $region28: #{nli_forward_padded.1} parent=1 // pred_region
      %55 = dma.done [#allocation4], 2944
    $region29: #{nli_forward_padded.1} parent=1 // pred_fallthru
      _
    %56 = sfence
    %s57 = sld [smem:[#allocation3]]
    %s58 = scalar_lea.vmem %s3, %s57
    %v59 = vld [vmem:[%s58] sm:$0x1]
    %vm60 = vcmask 253952
    %61 = vst.msk [vmem:[#allocation2] sm:$0x1] %vm60, %v59
    %s62 = sld [smem:[#allocation3 + $0x1]]
    %s63 = scalar_lea.vmem %s3, %s62
    %v64 = vld [vmem:[%s63] sm:$0x1]
    %65 = vst.msk [vmem:[#allocation2 + $0x1] sm:$0x1] %vm60, %v64
    %s66 = sld [smem:[#allocation3 + $0x2]]
    %s67 = scalar_lea.vmem %s3, %s66
    %v68 = vld [vmem:[%s67] sm:$0x1]
    %69 = vst.msk [vmem:[#allocation2 + $0x2] sm:$0x1] %vm60, %v68
    %s70 = sld [smem:[#allocation3 + $0x3]]
    %s71 = scalar_lea.vmem %s3, %s70
    %v72 = vld [vmem:[%s71] sm:$0x1]
    %73 = vst.msk [vmem:[#allocation2 + $0x3] sm:$0x1] %vm60, %v72
    %s74 = sld [smem:[#allocation3 + $0x4]]
    %s75 = scalar_lea.vmem %s3, %s74
    %v76 = vld [vmem:[%s75] sm:$0x1]
    %77 = vst.msk [vmem:[#allocation2 + $0x4] sm:$0x1] %vm60, %v76
    %s78 = sld [smem:[#allocation3 + $0x5]]
    %s79 = scalar_lea.vmem %s3, %s78
    %v80 = vld [vmem:[%s79] sm:$0x1]
    %81 = vst.msk [vmem:[#allocation2 + $0x5] sm:$0x1] %vm60, %v80
    %s82 = sld [smem:[#allocation3 + $0x6]]
    %s83 = scalar_lea.vmem %s3, %s82
    %v84 = vld [vmem:[%s83] sm:$0x1]
    %85 = vst.msk [vmem:[#allocation2 + $0x6] sm:$0x1] %vm60, %v84
    %s86 = sld [smem:[#allocation3 + $0x7]]
    %s87 = scalar_lea.vmem %s3, %s86
    %v88 = vld [vmem:[%s87] sm:$0x1]
    %89 = vst.msk [vmem:[#allocation2 + $0x7] sm:$0x1] %vm60, %v88
    %s90 = sld [smem:[#allocation3 + $0x80]]
    %s91 = scalar_lea.vmem %s3, %s90
    %v92 = vld [vmem:[%s91] sm:$0x1]
    %93 = vst.msk [vmem:[#allocation2 + $0x8] sm:$0x1] %vm60, %v92
    %s94 = sld [smem:[#allocation3 + $0x81]]
    %s95 = scalar_lea.vmem %s3, %s94
    %v96 = vld [vmem:[%s95] sm:$0x1]
    %97 = vst.msk [vmem:[#allocation2 + $0x9] sm:$0x1] %vm60, %v96
    %s98 = sld [smem:[#allocation3 + $0x82]]
    %s99 = scalar_lea.vmem %s3, %s98
    %v100 = vld [vmem:[%s99] sm:$0x1]
    %101 = vst.msk [vmem:[#allocation2 + $0xa] sm:$0x1] %vm60, %v100
    %s102 = sld [smem:[#allocation3 + $0x83]]
    %s103 = scalar_lea.vmem %s3, %s102
    %v104 = vld [vmem:[%s103] sm:$0x1]
    %105 = vst.msk [vmem:[#allocation2 + $0xb] sm:$0x1] %vm60, %v104
    %s106 = sld [smem:[#allocation3 + $0x84]]
    %s107 = scalar_lea.vmem %s3, %s106
    %v108 = vld [vmem:[%s107] sm:$0x1]
    %109 = vst.msk [vmem:[#allocation2 + $0xc] sm:$0x1] %vm60, %v108
    %s110 = sld [smem:[#allocation3 + $0x85]]
    %s111 = scalar_lea.vmem %s3, %s110
    %v112 = vld [vmem:[%s111] sm:$0x1]
    %113 = vst.msk [vmem:[#allocation2 + $0xd] sm:$0x1] %vm60, %v112
    %s114 = sld [smem:[#allocation3 + $0x86]]
    %s115 = scalar_lea.vmem %s3, %s114
    %v116 = vld [vmem:[%s115] sm:$0x1]
    %117 = vst.msk [vmem:[#allocation2 + $0xe] sm:$0x1] %vm60, %v116
    %s118 = sld [smem:[#allocation3 + $0x87]]
    %s119 = scalar_lea.vmem %s3, %s118
    %v120 = vld [vmem:[%s119] sm:$0x1]
    %121 = vst.msk [vmem:[#allocation2 + $0xf] sm:$0x1] %vm60, %v120
    %v122 = vld [vmem:[#allocation2] sm:$0xff]
    %v123 = vld [vmem:[#allocation2 + $0x8] sm:$0xff]
    %v124 = vld [vmem:[#allocation9 + $0xa4] sm:$0xff]
    %v125 = vld [vmem:[#allocation9 + $0xac] sm:$0xff]
    %v126 = vadd.f32 %v122, %v124
    %v127 = vadd.f32 %v123, %v125
    %v128 = vlaneseq
    %v129 = vand.u32 %v128, 127
    %s130 = sld [smem:[#allocation7]]
    %s131 = scvt.s32.f32 %s130
    %s132 = ssub.f32 %s131, 1.0
    %s133 = smul.f32 %s132, 1e+09
    %vm134 = vcmp.eq.s32.totalorder %v129, 0
    %v135 = vstv %s133
    %v136 = vsel %vm134, %v135, 0.0
    %s137 = sld [smem:[#allocation7 + $0x1]]
    %s138 = scvt.s32.f32 %s137
    %s139 = ssub.f32 %s138, 1.0
    %s140 = smul.f32 %s139, 1e+09
    %vm141 = vcmp.eq.s32.totalorder %v129, 1
    %v142 = vstv %s140
    %v143 = vsel %vm141, %v142, %v136
    %s144 = sld [smem:[#allocation7 + $0x2]]
    %s145 = scvt.s32.f32 %s144
    %s146 = ssub.f32 %s145, 1.0
    %s147 = smul.f32 %s146, 1e+09
    %vm148 = vcmp.eq.s32.totalorder %v129, 2
    %v149 = vstv %s147
    %v150 = vsel %vm148, %v149, %v143
    %s151 = sld [smem:[#allocation7 + $0x3]]
    %s152 = scvt.s32.f32 %s151
    %s153 = ssub.f32 %s152, 1.0
    %s154 = smul.f32 %s153, 1e+09
    %vm155 = vcmp.eq.s32.totalorder %v129, 3
    %v156 = vstv %s154
    %v157 = vsel %vm155, %v156, %v150
    %s158 = sld [smem:[#allocation7 + $0x4]]
    %s159 = scvt.s32.f32 %s158
    %s160 = ssub.f32 %s159, 1.0
    %s161 = smul.f32 %s160, 1e+09
    %vm162 = vcmp.eq.s32.totalorder %v129, 4
    %v163 = vstv %s161
    %v164 = vsel %vm162, %v163, %v157
    %s165 = sld [smem:[#allocation7 + $0x5]]
    %s166 = scvt.s32.f32 %s165
    %s167 = ssub.f32 %s166, 1.0
    %s168 = smul.f32 %s167, 1e+09
    %vm169 = vcmp.eq.s32.totalorder %v129, 5
    %v170 = vstv %s168
    %v171 = vsel %vm169, %v170, %v164
    %s172 = sld [smem:[#allocation7 + $0x6]]
    %s173 = scvt.s32.f32 %s172
    %s174 = ssub.f32 %s173, 1.0
    %s175 = smul.f32 %s174, 1e+09
    %vm176 = vcmp.eq.s32.totalorder %v129, 6
    %v177 = vstv %s175
    %v178 = vsel %vm176, %v177, %v171
    %s179 = sld [smem:[#allocation7 + $0x7]]
    %s180 = scvt.s32.f32 %s179
    %s181 = ssub.f32 %s180, 1.0
    %s182 = smul.f32 %s181, 1e+09
    %vm183 = vcmp.eq.s32.totalorder %v129, 7
    %v184 = vstv %s182
    %v185 = vsel %vm183, %v184, %v178
    %s186 = sld [smem:[#allocation7 + $0x80]]
    %s187 = scvt.s32.f32 %s186
    %s188 = ssub.f32 %s187, 1.0
    %s189 = smul.f32 %s188, 1e+09
    %vm190 = vcmp.eq.s32.totalorder %v129, 8
    %v191 = vstv %s189
    %v192 = vsel %vm190, %v191, %v185
    %s193 = sld [smem:[#allocation7 + $0x81]]
    %s194 = scvt.s32.f32 %s193
    %s195 = ssub.f32 %s194, 1.0
    %s196 = smul.f32 %s195, 1e+09
    %vm197 = vcmp.eq.s32.totalorder %v129, 9
    %v198 = vstv %s196
    %v199 = vsel %vm197, %v198, %v192
    %s200 = sld [smem:[#allocation7 + $0x82]]
    %s201 = scvt.s32.f32 %s200
    %s202 = ssub.f32 %s201, 1.0
    %s203 = smul.f32 %s202, 1e+09
    %vm204 = vcmp.eq.s32.totalorder %v129, 10
    %v205 = vstv %s203
    %v206 = vsel %vm204, %v205, %v199
    %s207 = sld [smem:[#allocation7 + $0x83]]
    %s208 = scvt.s32.f32 %s207
    %s209 = ssub.f32 %s208, 1.0
    %s210 = smul.f32 %s209, 1e+09
    %vm211 = vcmp.eq.s32.totalorder %v129, 11
    %v212 = vstv %s210
    %v213 = vsel %vm211, %v212, %v206
    %s214 = sld [smem:[#allocation7 + $0x84]]
    %s215 = scvt.s32.f32 %s214
    %s216 = ssub.f32 %s215, 1.0
    %s217 = smul.f32 %s216, 1e+09
    %vm218 = vcmp.eq.s32.totalorder %v129, 12
    %v219 = vstv %s217
    %v220 = vsel %vm218, %v219, %v213
    %s221 = sld [smem:[#allocation7 + $0x85]]
    %s222 = scvt.s32.f32 %s221
    %s223 = ssub.f32 %s222, 1.0
    %s224 = smul.f32 %s223, 1e+09
    %vm225 = vcmp.eq.s32.totalorder %v129, 13
    %v226 = vstv %s224
    %v227 = vsel %vm225, %v226, %v220
    %s228 = sld [smem:[#allocation7 + $0x86]]
    %s229 = scvt.s32.f32 %s228
    %s230 = ssub.f32 %s229, 1.0
    %s231 = smul.f32 %s230, 1e+09
    %vm232 = vcmp.eq.s32.totalorder %v129, 14
    %v233 = vstv %s231
    %v234 = vsel %vm232, %v233, %v227
    %s235 = sld [smem:[#allocation7 + $0x87]]
    %s236 = scvt.s32.f32 %s235
    %s237 = ssub.f32 %s236, 1.0
    %s238 = smul.f32 %s237, 1e+09
    %vm239 = vcmp.eq.s32.totalorder %v129, 15
    %v240 = vstv %s238
    %v241 = vsel %vm239, %v240, %v234
    %243 = vrot.lane.b32.xlu0 %v241, 32
    %v244 = vpop.permute.xlu0 %243
    %v246 = vadd.f32 %v124, %v244
    %v247 = vadd.f32 %v125, %v244
    %v248 = vld [vmem:[#allocation9] sm:$0xff]
    %v249 = vld [vmem:[#allocation9 + $0x8] sm:$0xff]
    %v250 = vld [vmem:[#allocation9 + $0x10] sm:$0xff]
    %v251 = vld [vmem:[#allocation9 + $0x18] sm:$0xff]
    %v252 = vld [vmem:[#allocation9 + $0xa0] sm:$0x1]
    %v253 = vlaneseq
    %v254 = vshrl.u32 %v253, 7
    %v255 = vsub.s32 0, %v254
    %v256 = vrot.slane %v252, %v255
    %vm257 = vcmask 261120
    %v259 = vsel %vm257, %v126, 0
    %v262 = vsel %vm257, %v127, 0
    %264 = vmatprep.subr.mxu0 0.0
    %265 = vmatpush1.msra.mxu0 %v248
    %266 = vmatprep.subr.mxu0 0.0
    %267 = vmatpush1.msra.mxu0 %v249
    %268 = vmatprep.subr.mxu0 0.0
    %269 = vmatpush1.msra.mxu0 %v250
    %270 = vmatprep.subr.mxu0 0.0
    %271 = vmatpush1.msra.mxu0 %v251
    %272 = vmatprep.subr.mxu0 0.0
    %273 = vmatpush1.msra.mxu0 0.0
    %274 = vmatprep.subr.mxu0 0.0
    %275 = vmatpush1.msra.mxu0 0.0
    %276 = vmatprep.subr.mxu0 0.0
    %277 = vmatpush1.msra.mxu0 0.0
    %278 = vmatprep.subr.mxu0 0.0
    %279 = vmatpush1.msra.mxu0 0.0
    %280 = vmatprep.subr.mxu0 0.0
    %281 = vmatpush1.msra.mxu0 0.0
    %282 = vmatprep.subr.mxu0 0.0
    %283 = vmatpush1.msra.mxu0 0.0
    %284 = vmatprep.subr.mxu0 0.0
    %285 = vmatpush1.msra.mxu0 0.0
    %286 = vmatprep.subr.mxu0 0.0
    %287 = vmatpush1.msra.mxu0 0.0
    %288 = vmatprep.subr.mxu0 0.0
    %289 = vmatpush1.msra.mxu0 0.0
    %290 = vmatprep.subr.mxu0 0.0
    %291 = vmatpush1.msra.mxu0 0.0
    %292 = vmatprep.subr.mxu0 0.0
    %293 = vmatpush1.msra.mxu0 0.0
    %294 = vmatprep.subr.mxu0 0.0
    %295 = vmatpush1.msra.mxu0 0.0
    %296 = vmatprep.subr.mxu0 0.0
    %297 = vmatpush1.msra.mxu0 0.0
    %298 = vmatprep.subr.mxu0 0.0
    %299 = vmatpush1.msra.mxu0 0.0
    %300 = vmatprep.subr.mxu0 0.0
    %301 = vmatpush1.msra.mxu0 0.0
    %302 = vmatprep.subr.mxu0 0.0
    %303 = vmatpush1.msra.mxu0 0.0
    %304 = vmatprep.subr.mxu0 0.0
    %305 = vmatpush1.msra.mxu0 0.0
    %306 = vmatprep.subr.mxu0 0.0
    %307 = vmatpush1.msra.mxu0 0.0
    %308 = vmatprep.subr.mxu0 0.0
    %309 = vmatpush1.msra.mxu0 0.0
    %310 = vmatprep.subr.mxu0 0.0
    %311 = vmatpush1.msra.mxu0 0.0
    %312 = vmatprep.subr.mxu0 0.0
    %313 = vmatpush1.msra.mxu0 0.0
    %314 = vmatprep.subr.mxu0 0.0
    %315 = vmatpush1.msra.mxu0 0.0
    %316 = vmatprep.subr.mxu0 0.0
    %317 = vmatpush1.msra.mxu0 0.0
    %318 = vmatprep.subr.mxu0 0.0
    %319 = vmatpush1.msra.mxu0 0.0
    %320 = vmatprep.subr.mxu0 0.0
    %321 = vmatpush1.msra.mxu0 0.0
    %322 = vmatprep.subr.mxu0 0.0
    %323 = vmatpush1.msra.mxu0 0.0
    %324 = vmatprep.subr.mxu0 0.0
    %325 = vmatpush1.msra.mxu0 0.0
    %326 = vmatprep.subr.mxu0 0.0
    %327 = vmatpush1.msra.mxu0 0.0
    %328 = vmatprep.mubr.f32.mxu0 0.0
    %329 = vmatmul.mubr.f32.gmra.mrb[0].mxu0 %v259
    %v330 = vpop.f32.mrb[0].mxu0
    %v331 = vadd.f32 %v256, %v330
    %v332 = vpop.f32.mrb[0].mxu0
    %333 = vmatprep.mubr.f32.mxu0 0.0
    %334 = vmatmul.mubr.f32.gmra.mrb[0].mxu0 %v262
    %v335 = vpop.f32.mrb[0].mxu0
    %v336 = vadd.f32 %v256, %v335
    %v337 = vpop.f32.mrb[0].mxu0
    %338 = vdwg.mxu0
    %341 = vrot.lane.b32.xlu0 %v331, 96
    %v342 = vpop.permute.xlu0 %341
    %343 = vrot.lane.b32.xlu0 %v336, 96
    %v344 = vpop.permute.xlu0 %343
    %347 = vrot.lane.b32.xlu0 %v246, 96
    %v348 = vpop.permute.xlu0 %347
    %349 = vrot.lane.b32.xlu0 %v247, 96
    %v350 = vpop.permute.xlu0 %349
    %vm353 = vcmask 130048
    %v354 = vsel %vm353, %v331, 0
    %v356 = vsel %vm353, %v336, 0
    %v358 = vsel %vm353, %v342, 0
    %v360 = vsel %vm353, %v344, 0
    %362 = vmatprep.subr.mxu0 0.0
    %363 = vmatpush1.xpose.msra.mxu0 %v358
    %364 = vmatprep.subr.mxu0 0.0
    %365 = vmatpush1.xpose.msra.mxu0 %v360
    %366 = vmatprep.subr.mxu0 0.0
    %367 = vmatpush1.xpose.msra.mxu0 0.0
    %368 = vmatprep.subr.mxu0 0.0
    %369 = vmatpush1.xpose.msra.mxu0 0.0
    %370 = vmatprep.subr.mxu0 0.0
    %371 = vmatpush1.xpose.msra.mxu0 0.0
    %372 = vmatprep.subr.mxu0 0.0
    %373 = vmatpush1.xpose.msra.mxu0 0.0
    %374 = vmatprep.subr.mxu0 0.0
    %375 = vmatpush1.xpose.msra.mxu0 0.0
    %376 = vmatprep.subr.mxu0 0.0
    %377 = vmatpush1.xpose.msra.mxu0 0.0
    %378 = vmatprep.subr.mxu0 0.0
    %379 = vmatpush1.xpose.msra.mxu0 0.0
    %380 = vmatprep.subr.mxu0 0.0
    %381 = vmatpush1.xpose.msra.mxu0 0.0
    %382 = vmatprep.subr.mxu0 0.0
    %383 = vmatpush1.xpose.msra.mxu0 0.0
    %384 = vmatprep.subr.mxu0 0.0
    %385 = vmatpush1.xpose.msra.mxu0 0.0
    %386 = vmatprep.subr.mxu0 0.0
    %387 = vmatpush1.xpose.msra.mxu0 0.0
    %388 = vmatprep.subr.mxu0 0.0
    %389 = vmatpush1.xpose.msra.mxu0 0.0
    %390 = vmatprep.subr.mxu0 0.0
    %391 = vmatpush1.xpose.msra.mxu0 0.0
    %392 = vmatprep.subr.mxu0 0.0
    %393 = vmatpush1.xpose.msra.mxu0 0.0
    %394 = vmatprep.subr.mxu0 0.0
    %395 = vmatpush1.xpose.msra.mxu0 0.0
    %396 = vmatprep.subr.mxu0 0.0
    %397 = vmatpush1.xpose.msra.mxu0 0.0
    %398 = vmatprep.subr.mxu0 0.0
    %399 = vmatpush1.xpose.msra.mxu0 0.0
    %400 = vmatprep.subr.mxu0 0.0
    %401 = vmatpush1.xpose.msra.mxu0 0.0
    %402 = vmatprep.subr.mxu0 0.0
    %403 = vmatpush1.xpose.msra.mxu0 0.0
    %404 = vmatprep.subr.mxu0 0.0
    %405 = vmatpush1.xpose.msra.mxu0 0.0
    %406 = vmatprep.subr.mxu0 0.0
    %407 = vmatpush1.xpose.msra.mxu0 0.0
    %408 = vmatprep.subr.mxu0 0.0
    %409 = vmatpush1.xpose.msra.mxu0 0.0
    %410 = vmatprep.subr.mxu0 0.0
    %411 = vmatpush1.xpose.msra.mxu0 0.0
    %412 = vmatprep.subr.mxu0 0.0
    %413 = vmatpush1.xpose.msra.mxu0 0.0
    %414 = vmatprep.subr.mxu0 0.0
    %415 = vmatpush1.xpose.msra.mxu0 0.0
    %416 = vmatprep.subr.mxu0 0.0
    %417 = vmatpush1.xpose.msra.mxu0 0.0
    %418 = vmatprep.subr.mxu0 0.0
    %419 = vmatpush1.xpose.msra.mxu0 0.0
    %420 = vmatprep.subr.mxu0 0.0
    %421 = vmatpush1.xpose.msra.mxu0 0.0
    %422 = vmatprep.subr.mxu0 0.0
    %423 = vmatpush1.xpose.msra.mxu0 0.0
    %424 = vmatprep.subr.mxu0 0.0
    %425 = vmatpush1.xpose.msra.mxu0 0.0
    %426 = vmatprep.mubr.f32.mxu0 0.0
    %427 = vmatmul.mubr.f32.gmra.mrb[0].mxu0 %v354
    %v428 = vpop.f32.mrb[0].mxu0
    %v429 = vadd.f32 %v348, %v428
    %v430 = vpop.f32.mrb[0].mxu0
    %431 = vmatprep.mubr.f32.mxu0 0.0
    %432 = vmatmul.mubr.f32.gmra.mrb[0].mxu0 %v356
    %v433 = vpop.f32.mrb[0].mxu0
    %v434 = vadd.f32 %v350, %v433
    %v435 = vpop.f32.mrb[0].mxu0
    %436 = vdwg.mxu0
    %v437 = vsel %vm353, %v429, -inf
    %438 = vmax.xlane.f32.xlu0 %v437
    %v439 = vpop.xlane.xlu0 %438
    %v440 = vsel %vm353, %v434, -inf
    %441 = vmax.xlane.f32.xlu0 %v440
    %v442 = vpop.xlane.xlu0 %441
    %v443 = vsub.f32 %v429, %v439
    %v444 = vsub.f32 %v434, %v442
    %v445 = vmul.f32 %v443, 1.442695
    %v446 = vpow.pop %v445
    %v447 = vmul.f32 %v444, 1.442695
    %v448 = vpow.pop %v447
    %v449 = vsel %vm353, %v446, 0.0
    %450 = vadd.xlane.f32.xlu0 %v449
    %v451 = vpop.xlane.xlu0 %450
    %v452 = vsel %vm353, %v448, 0.0
    %453 = vadd.xlane.f32.xlu0 %v452
    %v454 = vpop.xlane.xlu0 %453
    %v455 = vrcp.pop %v451
    %v456 = vmul.f32 %v446, %v455
    %v457 = vrcp.pop %v454
    %v458 = vmul.f32 %v448, %v457
    %459 = vrot.lane.b32.xlu0 %v331, 64
    %v460 = vpop.permute.xlu0 %459
    %461 = vrot.lane.b32.xlu0 %v336, 64
    %v462 = vpop.permute.xlu0 %461
    %v466 = vsel %vm353, %v456, 0
    %v469 = vsel %vm353, %v458, 0
    %471 = vmatprep.subr.mxu0 0.0
    %472 = vmatpush1.msra.mxu0 %v460
    %473 = vmatprep.subr.mxu0 0.0
    %474 = vmatpush1.msra.mxu0 %v462
    %475 = vmatprep.subr.mxu0 0.0
    %476 = vmatpush1.msra.mxu0 0.0
    %477 = vmatprep.subr.mxu0 0.0
    %478 = vmatpush1.msra.mxu0 0.0
    %479 = vmatprep.subr.mxu0 0.0
    %480 = vmatpush1.msra.mxu0 0.0
    %481 = vmatprep.subr.mxu0 0.0
    %482 = vmatpush1.msra.mxu0 0.0
    %483 = vmatprep.subr.mxu0 0.0
    %484 = vmatpush1.msra.mxu0 0.0
    %485 = vmatprep.subr.mxu0 0.0
    %486 = vmatpush1.msra.mxu0 0.0
    %487 = vmatprep.subr.mxu0 0.0
    %488 = vmatpush1.msra.mxu0 0.0
    %489 = vmatprep.subr.mxu0 0.0
    %490 = vmatpush1.msra.mxu0 0.0
    %491 = vmatprep.subr.mxu0 0.0
    %492 = vmatpush1.msra.mxu0 0.0
    %493 = vmatprep.subr.mxu0 0.0
    %494 = vmatpush1.msra.mxu0 0.0
    %495 = vmatprep.subr.mxu0 0.0
    %496 = vmatpush1.msra.mxu0 0.0
    %497 = vmatprep.subr.mxu0 0.0
    %498 = vmatpush1.msra.mxu0 0.0
    %499 = vmatprep.subr.mxu0 0.0
    %500 = vmatpush1.msra.mxu0 0.0
    %501 = vmatprep.subr.mxu0 0.0
    %502 = vmatpush1.msra.mxu0 0.0
    %503 = vmatprep.subr.mxu0 0.0
    %504 = vmatpush1.msra.mxu0 0.0
    %505 = vmatprep.subr.mxu0 0.0
    %506 = vmatpush1.msra.mxu0 0.0
    %507 = vmatprep.subr.mxu0 0.0
    %508 = vmatpush1.msra.mxu0 0.0
    %509 = vmatprep.subr.mxu0 0.0
    %510 = vmatpush1.msra.mxu0 0.0
    %511 = vmatprep.subr.mxu0 0.0
    %512 = vmatpush1.msra.mxu0 0.0
    %513 = vmatprep.subr.mxu0 0.0
    %514 = vmatpush1.msra.mxu0 0.0
    %515 = vmatprep.subr.mxu0 0.0
    %516 = vmatpush1.msra.mxu0 0.0
    %517 = vmatprep.subr.mxu0 0.0
    %518 = vmatpush1.msra.mxu0 0.0
    %519 = vmatprep.subr.mxu0 0.0
    %520 = vmatpush1.msra.mxu0 0.0
    %521 = vmatprep.subr.mxu0 0.0
    %522 = vmatpush1.msra.mxu0 0.0
    %523 = vmatprep.subr.mxu0 0.0
    %524 = vmatpush1.msra.mxu0 0.0
    %525 = vmatprep.subr.mxu0 0.0
    %526 = vmatpush1.msra.mxu0 0.0
    %527 = vmatprep.subr.mxu0 0.0
    %528 = vmatpush1.msra.mxu0 0.0
    %529 = vmatprep.subr.mxu0 0.0
    %530 = vmatpush1.msra.mxu0 0.0
    %531 = vmatprep.subr.mxu0 0.0
    %532 = vmatpush1.msra.mxu0 0.0
    %533 = vmatprep.subr.mxu0 0.0
    %534 = vmatpush1.msra.mxu0 0.0
    %535 = vmatprep.mubr.f32.mxu0 0.0
    %536 = vmatmul.mubr.f32.gmra.mrb[0].mxu0 %v466
    %v537 = vpop.f32.mrb[0].mxu0
    %v538 = vadd.f32 0.0, %v537
    %v539 = vpop.f32.mrb[0].mxu0
    %540 = vmatprep.mubr.f32.mxu0 0.0
    %541 = vmatmul.mubr.f32.gmra.mrb[0].mxu0 %v469
    %v542 = vpop.f32.mrb[0].mxu0
    %v543 = vadd.f32 0.0, %v542
    %v544 = vpop.f32.mrb[0].mxu0
    %545 = vdwg.mxu0
    %546 = vrot.lane.b32.xlu0 %v331, 112
    %v547 = vpop.permute.xlu0 %546
    %548 = vrot.lane.b32.xlu0 %v336, 112
    %v549 = vpop.permute.xlu0 %548
    %550 = vrot.lane.b32.xlu0 %v331, 80
    %v551 = vpop.permute.xlu0 %550
    %552 = vrot.lane.b32.xlu0 %v336, 80
    %v553 = vpop.permute.xlu0 %552
    %v554 = vsel %vm353, %v547, 0
    %v556 = vsel %vm353, %v549, 0
    %v558 = vsel %vm353, %v551, 0
    %v560 = vsel %vm353, %v553, 0
    %562 = vmatprep.subr.mxu0 0.0
    %563 = vmatpush1.xpose.msra.mxu0 %v558
    %564 = vmatprep.subr.mxu0 0.0
    %565 = vmatpush1.xpose.msra.mxu0 %v560
    %566 = vmatprep.subr.mxu0 0.0
    %567 = vmatpush1.xpose.msra.mxu0 0.0
    %568 = vmatprep.subr.mxu0 0.0
    %569 = vmatpush1.xpose.msra.mxu0 0.0
    %570 = vmatprep.subr.mxu0 0.0
    %571 = vmatpush1.xpose.msra.mxu0 0.0
    %572 = vmatprep.subr.mxu0 0.0
    %573 = vmatpush1.xpose.msra.mxu0 0.0
    %574 = vmatprep.subr.mxu0 0.0
    %575 = vmatpush1.xpose.msra.mxu0 0.0
    %576 = vmatprep.subr.mxu0 0.0
    %577 = vmatpush1.xpose.msra.mxu0 0.0
    %578 = vmatprep.subr.mxu0 0.0
    %579 = vmatpush1.xpose.msra.mxu0 0.0
    %580 = vmatprep.subr.mxu0 0.0
    %581 = vmatpush1.xpose.msra.mxu0 0.0
    %582 = vmatprep.subr.mxu0 0.0
    %583 = vmatpush1.xpose.msra.mxu0 0.0
    %584 = vmatprep.subr.mxu0 0.0
    %585 = vmatpush1.xpose.msra.mxu0 0.0
    %586 = vmatprep.subr.mxu0 0.0
    %587 = vmatpush1.xpose.msra.mxu0 0.0
    %588 = vmatprep.subr.mxu0 0.0
    %589 = vmatpush1.xpose.msra.mxu0 0.0
    %590 = vmatprep.subr.mxu0 0.0
    %591 = vmatpush1.xpose.msra.mxu0 0.0
    %592 = vmatprep.subr.mxu0 0.0
    %593 = vmatpush1.xpose.msra.mxu0 0.0
    %594 = vmatprep.subr.mxu0 0.0
    %595 = vmatpush1.xpose.msra.mxu0 0.0
    %596 = vmatprep.subr.mxu0 0.0
    %597 = vmatpush1.xpose.msra.mxu0 0.0
    %598 = vmatprep.subr.mxu0 0.0
    %599 = vmatpush1.xpose.msra.mxu0 0.0
    %600 = vmatprep.subr.mxu0 0.0
    %601 = vmatpush1.xpose.msra.mxu0 0.0
    %602 = vmatprep.subr.mxu0 0.0
    %603 = vmatpush1.xpose.msra.mxu0 0.0
    %604 = vmatprep.subr.mxu0 0.0
    %605 = vmatpush1.xpose.msra.mxu0 0.0
    %606 = vmatprep.subr.mxu0 0.0
    %607 = vmatpush1.xpose.msra.mxu0 0.0
    %608 = vmatprep.subr.mxu0 0.0
    %609 = vmatpush1.xpose.msra.mxu0 0.0
    %610 = vmatprep.subr.mxu0 0.0
    %611 = vmatpush1.xpose.msra.mxu0 0.0
    %612 = vmatprep.subr.mxu0 0.0
    %613 = vmatpush1.xpose.msra.mxu0 0.0
    %614 = vmatprep.subr.mxu0 0.0
    %615 = vmatpush1.xpose.msra.mxu0 0.0
    %616 = vmatprep.subr.mxu0 0.0
    %617 = vmatpush1.xpose.msra.mxu0 0.0
    %618 = vmatprep.subr.mxu0 0.0
    %619 = vmatpush1.xpose.msra.mxu0 0.0
    %620 = vmatprep.subr.mxu0 0.0
    %621 = vmatpush1.xpose.msra.mxu0 0.0
    %622 = vmatprep.subr.mxu0 0.0
    %623 = vmatpush1.xpose.msra.mxu0 0.0
    %624 = vmatprep.subr.mxu0 0.0
    %625 = vmatpush1.xpose.msra.mxu0 0.0
    %626 = vmatprep.mubr.f32.mxu0 0.0
    %627 = vmatmul.mubr.f32.gmra.mrb[0].mxu0 %v554
    %v628 = vpop.f32.mrb[0].mxu0
    %v629 = vadd.f32 %v348, %v628
    %v630 = vpop.f32.mrb[0].mxu0
    %631 = vmatprep.mubr.f32.mxu0 0.0
    %632 = vmatmul.mubr.f32.gmra.mrb[0].mxu0 %v556
    %v633 = vpop.f32.mrb[0].mxu0
    %v634 = vadd.f32 %v350, %v633
    %v635 = vpop.f32.mrb[0].mxu0
    %636 = vdwg.mxu0
    %v637 = vsel %vm353, %v629, -inf
    %638 = vmax.xlane.f32.xlu0 %v637
    %v639 = vpop.xlane.xlu0 %638
    %v640 = vsel %vm353, %v634, -inf
    %641 = vmax.xlane.f32.xlu0 %v640
    %v642 = vpop.xlane.xlu0 %641
    %v643 = vsub.f32 %v629, %v639
    %v644 = vsub.f32 %v634, %v642
    %v645 = vmul.f32 %v643, 1.442695
    %v646 = vpow.pop %v645
    %v647 = vmul.f32 %v644, 1.442695
    %v648 = vpow.pop %v647
    %v649 = vsel %vm353, %v646, 0.0
    %650 = vadd.xlane.f32.xlu0 %v649
    %v651 = vpop.xlane.xlu0 %650
    %v652 = vsel %vm353, %v648, 0.0
    %653 = vadd.xlane.f32.xlu0 %v652
    %v654 = vpop.xlane.xlu0 %653
    %v655 = vrcp.pop %v651
    %v656 = vmul.f32 %v646, %v655
    %v657 = vrcp.pop %v654
    %v658 = vmul.f32 %v648, %v657
    %659 = vrot.lane.b32.xlu0 %v331, 48
    %v660 = vpop.permute.xlu0 %659
    %661 = vrot.lane.b32.xlu0 %v336, 48
    %v662 = vpop.permute.xlu0 %661
    %v666 = vsel %vm353, %v656, 0
    %v669 = vsel %vm353, %v658, 0
    %671 = vmatprep.subr.mxu0 0.0
    %672 = vmatpush1.msra.mxu0 %v660
    %673 = vmatprep.subr.mxu0 0.0
    %674 = vmatpush1.msra.mxu0 %v662
    %675 = vmatprep.subr.mxu0 0.0
    %676 = vmatpush1.msra.mxu0 0.0
    %677 = vmatprep.subr.mxu0 0.0
    %678 = vmatpush1.msra.mxu0 0.0
    %679 = vmatprep.subr.mxu0 0.0
    %680 = vmatpush1.msra.mxu0 0.0
    %681 = vmatprep.subr.mxu0 0.0
    %682 = vmatpush1.msra.mxu0 0.0
    %683 = vmatprep.subr.mxu0 0.0
    %684 = vmatpush1.msra.mxu0 0.0
    %685 = vmatprep.subr.mxu0 0.0
    %686 = vmatpush1.msra.mxu0 0.0
    %687 = vmatprep.subr.mxu0 0.0
    %688 = vmatpush1.msra.mxu0 0.0
    %689 = vmatprep.subr.mxu0 0.0
    %690 = vmatpush1.msra.mxu0 0.0
    %691 = vmatprep.subr.mxu0 0.0
    %692 = vmatpush1.msra.mxu0 0.0
    %693 = vmatprep.subr.mxu0 0.0
    %694 = vmatpush1.msra.mxu0 0.0
    %695 = vmatprep.subr.mxu0 0.0
    %696 = vmatpush1.msra.mxu0 0.0
    %697 = vmatprep.subr.mxu0 0.0
    %698 = vmatpush1.msra.mxu0 0.0
    %699 = vmatprep.subr.mxu0 0.0
    %700 = vmatpush1.msra.mxu0 0.0
    %701 = vmatprep.subr.mxu0 0.0
    %702 = vmatpush1.msra.mxu0 0.0
    %703 = vmatprep.subr.mxu0 0.0
    %704 = vmatpush1.msra.mxu0 0.0
    %705 = vmatprep.subr.mxu0 0.0
    %706 = vmatpush1.msra.mxu0 0.0
    %707 = vmatprep.subr.mxu0 0.0
    %708 = vmatpush1.msra.mxu0 0.0
    %709 = vmatprep.subr.mxu0 0.0
    %710 = vmatpush1.msra.mxu0 0.0
    %711 = vmatprep.subr.mxu0 0.0
    %712 = vmatpush1.msra.mxu0 0.0
    %713 = vmatprep.subr.mxu0 0.0
    %714 = vmatpush1.msra.mxu0 0.0
    %715 = vmatprep.subr.mxu0 0.0
    %716 = vmatpush1.msra.mxu0 0.0
    %717 = vmatprep.subr.mxu0 0.0
    %718 = vmatpush1.msra.mxu0 0.0
    %719 = vmatprep.subr.mxu0 0.0
    %720 = vmatpush1.msra.mxu0 0.0
    %721 = vmatprep.subr.mxu0 0.0
    %722 = vmatpush1.msra.mxu0 0.0
    %723 = vmatprep.subr.mxu0 0.0
    %724 = vmatpush1.msra.mxu0 0.0
    %725 = vmatprep.subr.mxu0 0.0
    %726 = vmatpush1.msra.mxu0 0.0
    %727 = vmatprep.subr.mxu0 0.0
    %728 = vmatpush1.msra.mxu0 0.0
    %729 = vmatprep.subr.mxu0 0.0
    %730 = vmatpush1.msra.mxu0 0.0
    %731 = vmatprep.subr.mxu0 0.0
    %732 = vmatpush1.msra.mxu0 0.0
    %733 = vmatprep.subr.mxu0 0.0
    %734 = vmatpush1.msra.mxu0 0.0
    %735 = vmatprep.mubr.f32.mxu0 0.0
    %736 = vmatmul.mubr.f32.gmra.mrb[0].mxu0 %v666
    %v737 = vpop.f32.mrb[0].mxu0
    %v738 = vadd.f32 0.0, %v737
    %v739 = vpop.f32.mrb[0].mxu0
    %740 = vmatprep.mubr.f32.mxu0 0.0
    %741 = vmatmul.mubr.f32.gmra.mrb[0].mxu0 %v669
    %v742 = vpop.f32.mrb[0].mxu0
    %v743 = vadd.f32 0.0, %v742
    %v744 = vpop.f32.mrb[0].mxu0
    %745 = vdwg.mxu0
    %748 = vrot.lane.b32.xlu0 %v738, 16
    %v749 = vpop.permute.xlu0 %748
    %750 = vrot.lane.b32.xlu0 %v743, 16
    %v751 = vpop.permute.xlu0 %750
    %v754 = vsel %vm353, %v538, %v749
    %v755 = vsel %vm353, %v543, %v751
    %760 = vrot.lane.b32.xlu0 %v248, 32
    %v761 = vpop.permute.xlu0 %760
    %762 = vrot.lane.b32.xlu0 %v249, 32
    %v763 = vpop.permute.xlu0 %762
    %764 = vrot.lane.b32.xlu0 %v250, 32
    %v765 = vpop.permute.xlu0 %764
    %766 = vrot.lane.b32.xlu0 %v251, 32
    %v767 = vpop.permute.xlu0 %766
    %773 = vrot.lane.b32.xlu0 %v256, 32
    %v774 = vpop.permute.xlu0 %773
    %v777 = vsel %vm257, %v754, 0
    %v780 = vsel %vm257, %v755, 0
    %782 = vmatprep.subr.mxu0 0.0
    %783 = vmatpush1.msra.mxu0 %v761
    %784 = vmatprep.subr.mxu0 0.0
    %785 = vmatpush1.msra.mxu0 %v763
    %786 = vmatprep.subr.mxu0 0.0
    %787 = vmatpush1.msra.mxu0 %v765
    %788 = vmatprep.subr.mxu0 0.0
    %789 = vmatpush1.msra.mxu0 %v767
    %790 = vmatprep.subr.mxu0 0.0
    %791 = vmatpush1.msra.mxu0 0.0
    %792 = vmatprep.subr.mxu0 0.0
    %793 = vmatpush1.msra.mxu0 0.0
    %794 = vmatprep.subr.mxu0 0.0
    %795 = vmatpush1.msra.mxu0 0.0
    %796 = vmatprep.subr.mxu0 0.0
    %797 = vmatpush1.msra.mxu0 0.0
    %798 = vmatprep.subr.mxu0 0.0
    %799 = vmatpush1.msra.mxu0 0.0
    %800 = vmatprep.subr.mxu0 0.0
    %801 = vmatpush1.msra.mxu0 0.0
    %802 = vmatprep.subr.mxu0 0.0
    %803 = vmatpush1.msra.mxu0 0.0
    %804 = vmatprep.subr.mxu0 0.0
    %805 = vmatpush1.msra.mxu0 0.0
    %806 = vmatprep.subr.mxu0 0.0
    %807 = vmatpush1.msra.mxu0 0.0
    %808 = vmatprep.subr.mxu0 0.0
    %809 = vmatpush1.msra.mxu0 0.0
    %810 = vmatprep.subr.mxu0 0.0
    %811 = vmatpush1.msra.mxu0 0.0
    %812 = vmatprep.subr.mxu0 0.0
    %813 = vmatpush1.msra.mxu0 0.0
    %814 = vmatprep.subr.mxu0 0.0
    %815 = vmatpush1.msra.mxu0 0.0
    %816 = vmatprep.subr.mxu0 0.0
    %817 = vmatpush1.msra.mxu0 0.0
    %818 = vmatprep.subr.mxu0 0.0
    %819 = vmatpush1.msra.mxu0 0.0
    %820 = vmatprep.subr.mxu0 0.0
    %821 = vmatpush1.msra.mxu0 0.0
    %822 = vmatprep.subr.mxu0 0.0
    %823 = vmatpush1.msra.mxu0 0.0
    %824 = vmatprep.subr.mxu0 0.0
    %825 = vmatpush1.msra.mxu0 0.0
    %826 = vmatprep.subr.mxu0 0.0
    %827 = vmatpush1.msra.mxu0 0.0
    %828 = vmatprep.subr.mxu0 0.0
    %829 = vmatpush1.msra.mxu0 0.0
    %830 = vmatprep.subr.mxu0 0.0
    %831 = vmatpush1.msra.mxu0 0.0
    %832 = vmatprep.subr.mxu0 0.0
    %833 = vmatpush1.msra.mxu0 0.0
    %834 = vmatprep.subr.mxu0 0.0
    %835 = vmatpush1.msra.mxu0 0.0
    %836 = vmatprep.subr.mxu0 0.0
    %837 = vmatpush1.msra.mxu0 0.0
    %838 = vmatprep.subr.mxu0 0.0
    %839 = vmatpush1.msra.mxu0 0.0
    %840 = vmatprep.subr.mxu0 0.0
    %841 = vmatpush1.msra.mxu0 0.0
    %842 = vmatprep.subr.mxu0 0.0
    %843 = vmatpush1.msra.mxu0 0.0
    %844 = vmatprep.subr.mxu0 0.0
    %845 = vmatpush1.msra.mxu0 0.0
    %846 = vmatprep.mubr.f32.mxu0 0.0
    %847 = vmatmul.mubr.f32.gmra.mrb[0].mxu0 %v777
    %v848 = vpop.f32.mrb[0].mxu0
    %v849 = vadd.f32 %v774, %v848
    %v850 = vpop.f32.mrb[0].mxu0
    %851 = vmatprep.mubr.f32.mxu0 0.0
    %852 = vmatmul.mubr.f32.gmra.mrb[0].mxu0 %v780
    %v853 = vpop.f32.mrb[0].mxu0
    %v854 = vadd.f32 %v774, %v853
    %v855 = vpop.f32.mrb[0].mxu0
    %856 = vdwg.mxu0
    %v857 = vadd.f32 %v126, %v849
    %v858 = vadd.f32 %v127, %v854
    %v859 = vld [vmem:[#allocation9 + $0xa1] sm:$0x1]
    %v860 = vsel %vm257, %v857, 0.0
    %861 = vadd.xlane.f32.xlu0 %v860
    %v862 = vpop.xlane.xlu0 %861
    %v863 = vsel %vm257, %v858, 0.0
    %864 = vadd.xlane.f32.xlu0 %v863
    %v865 = vpop.xlane.xlu0 %864
    %v866 = vrcp.pop 32.0
    %v867 = vmul.f32 %v862, %v866
    %v868 = vmul.f32 %v865, %v866
    %v869 = vsub.f32 %v857, %v867
    %v870 = vsub.f32 %v858, %v868
    %v871 = vmul.f32 %v869, %v869
    %v872 = vmul.f32 %v870, %v870
    %v873 = vsel %vm257, %v871, 0.0
    %874 = vadd.xlane.f32.xlu0 %v873
    %v875 = vpop.xlane.xlu0 %874
    %v876 = vsel %vm257, %v872, 0.0
    %877 = vadd.xlane.f32.xlu0 %v876
    %v878 = vpop.xlane.xlu0 %877
    %v879 = vmul.f32 %v875, %v866
    %v880 = vmul.f32 %v878, %v866
    %v881 = vadd.f32 %v879, 1e-12
    %v882 = vadd.f32 %v880, 1e-12
    %v883 = vrsqrt.pop %v881
    %v884 = vrsqrt.pop %v882
    %v885 = vmul.f32 %v869, %v883
    %v886 = vmul.f32 %v870, %v884
    %v887 = vlaneseq
    %v888 = vshrl.u32 %v887, 7
    %v889 = vsub.s32 0, %v888
    %v890 = vrot.slane %v859, %v889
    %892 = vrot.lane.b32.xlu0 %v890, 64
    %v893 = vpop.permute.xlu0 %892
    %v895 = vmul.f32 %v885, %v893
    %v896 = vmul.f32 %v886, %v893
    %897 = vrot.lane.b32.xlu0 %v890, 32
    %v898 = vpop.permute.xlu0 %897
    %v900 = vadd.f32 %v895, %v898
    %v901 = vadd.f32 %v896, %v898
    %902 = vst.msk [vmem:[#allocation2] sm:$0xff] %vm257, %v900
    %903 = vst.msk [vmem:[#allocation2 + $0x8] sm:$0xff] %vm257, %v901
    %v904 = vld [vmem:[#allocation2] ss:$8 sm:$0x3]
    %v905 = vld [vmem:[#allocation9 + $0x20] sm:$0xff]
    %v906 = vld [vmem:[#allocation9 + $0x28] sm:$0xff]
    %v907 = vld [vmem:[#allocation9 + $0x30] sm:$0xff]
    %v908 = vld [vmem:[#allocation9 + $0x38] sm:$0xff]
    %v909 = vld [vmem:[#allocation9 + $0xa1] sm:$0x1]
    %v910 = vlaneseq
    %v911 = vshrl.u32 %v910, 7
    %v912 = vsub.s32 0, %v911
    %v913 = vrot.slane %v909, %v912
    %v915 = vsel %vm257, %v904, 0
    %917 = vmatprep.subr.mxu0 0.0
    %918 = vmatpush1.msra.mxu0 %v905
    %919 = vmatprep.subr.mxu0 0.0
    %920 = vmatpush1.msra.mxu0 %v906
    %921 = vmatprep.subr.mxu0 0.0
    %922 = vmatpush1.msra.mxu0 %v907
    %923 = vmatprep.subr.mxu0 0.0
    %924 = vmatpush1.msra.mxu0 %v908
    %925 = vmatprep.subr.mxu0 0.0
    %926 = vmatpush1.msra.mxu0 0.0
    %927 = vmatprep.subr.mxu0 0.0
    %928 = vmatpush1.msra.mxu0 0.0
    %929 = vmatprep.subr.mxu0 0.0
    %930 = vmatpush1.msra.mxu0 0.0
    %931 = vmatprep.subr.mxu0 0.0
    %932 = vmatpush1.msra.mxu0 0.0
    %933 = vmatprep.subr.mxu0 0.0
    %934 = vmatpush1.msra.mxu0 0.0
    %935 = vmatprep.subr.mxu0 0.0
    %936 = vmatpush1.msra.mxu0 0.0
    %937 = vmatprep.subr.mxu0 0.0
    %938 = vmatpush1.msra.mxu0 0.0
    %939 = vmatprep.subr.mxu0 0.0
    %940 = vmatpush1.msra.mxu0 0.0
    %941 = vmatprep.subr.mxu0 0.0
    %942 = vmatpush1.msra.mxu0 0.0
    %943 = vmatprep.subr.mxu0 0.0
    %944 = vmatpush1.msra.mxu0 0.0
    %945 = vmatprep.subr.mxu0 0.0
    %946 = vmatpush1.msra.mxu0 0.0
    %947 = vmatprep.subr.mxu0 0.0
    %948 = vmatpush1.msra.mxu0 0.0
    %949 = vmatprep.subr.mxu0 0.0
    %950 = vmatpush1.msra.mxu0 0.0
    %951 = vmatprep.subr.mxu0 0.0
    %952 = vmatpush1.msra.mxu0 0.0
    %953 = vmatprep.subr.mxu0 0.0
    %954 = vmatpush1.msra.mxu0 0.0
    %955 = vmatprep.subr.mxu0 0.0
    %956 = vmatpush1.msra.mxu0 0.0
    %957 = vmatprep.subr.mxu0 0.0
    %958 = vmatpush1.msra.mxu0 0.0
    %959 = vmatprep.subr.mxu0 0.0
    %960 = vmatpush1.msra.mxu0 0.0
    %961 = vmatprep.subr.mxu0 0.0
    %962 = vmatpush1.msra.mxu0 0.0
    %963 = vmatprep.subr.mxu0 0.0
    %964 = vmatpush1.msra.mxu0 0.0
    %965 = vmatprep.subr.mxu0 0.0
    %966 = vmatpush1.msra.mxu0 0.0
    %967 = vmatprep.subr.mxu0 0.0
    %968 = vmatpush1.msra.mxu0 0.0
    %969 = vmatprep.subr.mxu0 0.0
    %970 = vmatpush1.msra.mxu0 0.0
    %971 = vmatprep.subr.mxu0 0.0
    %972 = vmatpush1.msra.mxu0 0.0
    %973 = vmatprep.subr.mxu0 0.0
    %974 = vmatpush1.msra.mxu0 0.0
    %975 = vmatprep.subr.mxu0 0.0
    %976 = vmatpush1.msra.mxu0 0.0
    %977 = vmatprep.subr.mxu0 0.0
    %978 = vmatpush1.msra.mxu0 0.0
    %979 = vmatprep.subr.mxu0 0.0
    %980 = vmatpush1.msra.mxu0 0.0
    %981 = vmatprep.mubr.f32.mxu0 0.0
    %982 = vmatmul.mubr.f32.gmra.mrb[0].mxu0 %v915
    %v983 = vpop.f32.mrb[0].mxu0
    %v984 = vadd.f32 %v913, %v983
    %v985 = vpop.f32.mrb[0].mxu0
    %986 = vdwg.mxu0
    %v987 = vmul.f32 %v984, %v984
    %v988 = vmul.f32 %v984, %v987
    %v989 = vmul.f32 %v988, 0.044715
    %v990 = vadd.f32 %v984, %v989
    %v991 = vmul.f32 %v990, 0.7978846
    %v992 = vtanh.pop %v991
    %v993 = vadd.f32 %v992, 1.0
    %v994 = vmul.f32 %v993, 0.5
    %v995 = vmul.f32 %v984, %v994
    %v996 = vld [vmem:[#allocation9 + $0x40] sm:$0xff]
    %v997 = vld [vmem:[#allocation9 + $0x48] sm:$0xff]
    %v998 = vld [vmem:[#allocation9 + $0x50] sm:$0xff]
    %v999 = vld [vmem:[#allocation9 + $0x58] sm:$0xff]
    %v1000 = vld [vmem:[#allocation9 + $0x60] sm:$0xff]
    %v1001 = vld [vmem:[#allocation9 + $0x68] sm:$0xff]
    %v1002 = vld [vmem:[#allocation9 + $0x70] sm:$0xff]
    %v1003 = vld [vmem:[#allocation9 + $0x78] sm:$0xff]
    %v1004 = vld [vmem:[#allocation9 + $0xa2] sm:$0x1]
    %v1005 = vlaneseq
    %v1006 = vshrl.u32 %v1005, 7
    %v1007 = vsub.s32 0, %v1006
    %v1008 = vrot.slane %v1004, %v1007
    %vm1009 = vcmask 523264
    %v1011 = vsel %vm1009, %v995, 0
    %1013 = vmatprep.subr.mxu0 0.0
    %1014 = vmatpush1.msra.mxu0 %v996
    %1015 = vmatprep.subr.mxu0 0.0
    %1016 = vmatpush1.msra.mxu0 %v997
    %1017 = vmatprep.subr.mxu0 0.0
    %1018 = vmatpush1.msra.mxu0 %v998
    %1019 = vmatprep.subr.mxu0 0.0
    %1020 = vmatpush1.msra.mxu0 %v999
    %1021 = vmatprep.subr.mxu0 0.0
    %1022 = vmatpush1.msra.mxu0 %v1000
    %1023 = vmatprep.subr.mxu0 0.0
    %1024 = vmatpush1.msra.mxu0 %v1001
    %1025 = vmatprep.subr.mxu0 0.0
    %1026 = vmatpush1.msra.mxu0 %v1002
    %1027 = vmatprep.subr.mxu0 0.0
    %1028 = vmatpush1.msra.mxu0 %v1003
    %1029 = vmatprep.subr.mxu0 0.0
    %1030 = vmatpush1.msra.mxu0 0.0
    %1031 = vmatprep.subr.mxu0 0.0
    %1032 = vmatpush1.msra.mxu0 0.0
    %1033 = vmatprep.subr.mxu0 0.0
    %1034 = vmatpush1.msra.mxu0 0.0
    %1035 = vmatprep.subr.mxu0 0.0
    %1036 = vmatpush1.msra.mxu0 0.0
    %1037 = vmatprep.subr.mxu0 0.0
    %1038 = vmatpush1.msra.mxu0 0.0
    %1039 = vmatprep.subr.mxu0 0.0
    %1040 = vmatpush1.msra.mxu0 0.0
    %1041 = vmatprep.subr.mxu0 0.0
    %1042 = vmatpush1.msra.mxu0 0.0
    %1043 = vmatprep.subr.mxu0 0.0
    %1044 = vmatpush1.msra.mxu0 0.0
    %1045 = vmatprep.subr.mxu0 0.0
    %1046 = vmatpush1.msra.mxu0 0.0
    %1047 = vmatprep.subr.mxu0 0.0
    %1048 = vmatpush1.msra.mxu0 0.0
    %1049 = vmatprep.subr.mxu0 0.0
    %1050 = vmatpush1.msra.mxu0 0.0
    %1051 = vmatprep.subr.mxu0 0.0
    %1052 = vmatpush1.msra.mxu0 0.0
    %1053 = vmatprep.subr.mxu0 0.0
    %1054 = vmatpush1.msra.mxu0 0.0
    %1055 = vmatprep.subr.mxu0 0.0
    %1056 = vmatpush1.msra.mxu0 0.0
    %1057 = vmatprep.subr.mxu0 0.0
    %1058 = vmatpush1.msra.mxu0 0.0
    %1059 = vmatprep.subr.mxu0 0.0
    %1060 = vmatpush1.msra.mxu0 0.0
    %1061 = vmatprep.subr.mxu0 0.0
    %1062 = vmatpush1.msra.mxu0 0.0
    %1063 = vmatprep.subr.mxu0 0.0
    %1064 = vmatpush1.msra.mxu0 0.0
    %1065 = vmatprep.subr.mxu0 0.0
    %1066 = vmatpush1.msra.mxu0 0.0
    %1067 = vmatprep.subr.mxu0 0.0
    %1068 = vmatpush1.msra.mxu0 0.0
    %1069 = vmatprep.subr.mxu0 0.0
    %1070 = vmatpush1.msra.mxu0 0.0
    %1071 = vmatprep.subr.mxu0 0.0
    %1072 = vmatpush1.msra.mxu0 0.0
    %1073 = vmatprep.subr.mxu0 0.0
    %1074 = vmatpush1.msra.mxu0 0.0
    %1075 = vmatprep.subr.mxu0 0.0
    %1076 = vmatpush1.msra.mxu0 0.0
    %1077 = vmatprep.mubr.f32.mxu0 0.0
    %1078 = vmatmul.mubr.f32.gmra.mrb[0].mxu0 %v1011
    %v1079 = vpop.f32.mrb[0].mxu0
    %v1080 = vadd.f32 %v1008, %v1079
    %v1081 = vpop.f32.mrb[0].mxu0
    %1082 = vdwg.mxu0
    %v1083 = vadd.f32 %v904, %v1080
    %vm1084 = vcmask 254976
    %v1085 = vsel %vm1084, %v1083, 0.0
    %1086 = vadd.xlane.f32.xlu0 %v1085
    %v1087 = vpop.xlane.xlu0 %1086
    %v1088 = vmul.f32 %v1087, %v866
    %v1089 = vsub.f32 %v1083, %v1088
    %v1090 = vmul.f32 %v1089, %v1089
    %v1091 = vsel %vm1084, %v1090, 0.0
    %1092 = vadd.xlane.f32.xlu0 %v1091
    %v1093 = vpop.xlane.xlu0 %1092
    %v1094 = vmul.f32 %v1093, %v866
    %v1095 = vadd.f32 %v1094, 1e-12
    %v1096 = vrsqrt.pop %v1095
    %v1097 = vmul.f32 %v1089, %v1096
    %1099 = vrot.lane.b32.xlu0 %v1008, 96
    %v1100 = vpop.permute.xlu0 %1099
    %v1102 = vmul.f32 %v1097, %v1100
    %1103 = vrot.lane.b32.xlu0 %v1008, 64
    %v1104 = vpop.permute.xlu0 %1103
    %v1106 = vadd.f32 %v1102, %v1104
    %v1107 = vld [vmem:[#allocation9 + $0x80] sm:$0xff]
    %v1108 = vld [vmem:[#allocation9 + $0x88] sm:$0xff]
    %v1109 = vld [vmem:[#allocation9 + $0x90] sm:$0xff]
    %v1110 = vld [vmem:[#allocation9 + $0x98] sm:$0xff]
    %v1111 = vld [vmem:[#allocation9 + $0xa3] sm:$0x1]
    %v1112 = vlaneseq
    %v1113 = vshrl.u32 %v1112, 7
    %v1114 = vsub.s32 0, %v1113
    %v1115 = vrot.slane %v1111, %v1114
    %v1117 = vsel %vm257, %v1106, 0
    %1119 = vmatprep.subr.mxu0 0.0
    %1120 = vmatpush1.msra.mxu0 %v1107
    %1121 = vmatprep.subr.mxu0 0.0
    %1122 = vmatpush1.msra.mxu0 %v1108
    %1123 = vmatprep.subr.mxu0 0.0
    %1124 = vmatpush1.msra.mxu0 %v1109
    %1125 = vmatprep.subr.mxu0 0.0
    %1126 = vmatpush1.msra.mxu0 %v1110
    %1127 = vmatprep.subr.mxu0 0.0
    %1128 = vmatpush1.msra.mxu0 0.0
    %1129 = vmatprep.subr.mxu0 0.0
    %1130 = vmatpush1.msra.mxu0 0.0
    %1131 = vmatprep.subr.mxu0 0.0
    %1132 = vmatpush1.msra.mxu0 0.0
    %1133 = vmatprep.subr.mxu0 0.0
    %1134 = vmatpush1.msra.mxu0 0.0
    %1135 = vmatprep.subr.mxu0 0.0
    %1136 = vmatpush1.msra.mxu0 0.0
    %1137 = vmatprep.subr.mxu0 0.0
    %1138 = vmatpush1.msra.mxu0 0.0
    %1139 = vmatprep.subr.mxu0 0.0
    %1140 = vmatpush1.msra.mxu0 0.0
    %1141 = vmatprep.subr.mxu0 0.0
    %1142 = vmatpush1.msra.mxu0 0.0
    %1143 = vmatprep.subr.mxu0 0.0
    %1144 = vmatpush1.msra.mxu0 0.0
    %1145 = vmatprep.subr.mxu0 0.0
    %1146 = vmatpush1.msra.mxu0 0.0
    %1147 = vmatprep.subr.mxu0 0.0
    %1148 = vmatpush1.msra.mxu0 0.0
    %1149 = vmatprep.subr.mxu0 0.0
    %1150 = vmatpush1.msra.mxu0 0.0
    %1151 = vmatprep.subr.mxu0 0.0
    %1152 = vmatpush1.msra.mxu0 0.0
    %1153 = vmatprep.subr.mxu0 0.0
    %1154 = vmatpush1.msra.mxu0 0.0
    %1155 = vmatprep.subr.mxu0 0.0
    %1156 = vmatpush1.msra.mxu0 0.0
    %1157 = vmatprep.subr.mxu0 0.0
    %1158 = vmatpush1.msra.mxu0 0.0
    %1159 = vmatprep.subr.mxu0 0.0
    %1160 = vmatpush1.msra.mxu0 0.0
    %1161 = vmatprep.subr.mxu0 0.0
    %1162 = vmatpush1.msra.mxu0 0.0
    %1163 = vmatprep.subr.mxu0 0.0
    %1164 = vmatpush1.msra.mxu0 0.0
    %1165 = vmatprep.subr.mxu0 0.0
    %1166 = vmatpush1.msra.mxu0 0.0
    %1167 = vmatprep.subr.mxu0 0.0
    %1168 = vmatpush1.msra.mxu0 0.0
    %1169 = vmatprep.subr.mxu0 0.0
    %1170 = vmatpush1.msra.mxu0 0.0
    %1171 = vmatprep.subr.mxu0 0.0
    %1172 = vmatpush1.msra.mxu0 0.0
    %1173 = vmatprep.subr.mxu0 0.0
    %1174 = vmatpush1.msra.mxu0 0.0
    %1175 = vmatprep.subr.mxu0 0.0
    %1176 = vmatpush1.msra.mxu0 0.0
    %1177 = vmatprep.subr.mxu0 0.0
    %1178 = vmatpush1.msra.mxu0 0.0
    %1179 = vmatprep.subr.mxu0 0.0
    %1180 = vmatpush1.msra.mxu0 0.0
    %1181 = vmatprep.subr.mxu0 0.0
    %1182 = vmatpush1.msra.mxu0 0.0
    %1183 = vmatprep.mubr.f32.mxu0 0.0
    %1184 = vmatmul.mubr.f32.gmra.mrb[0].mxu0 %v1117
    %v1185 = vpop.f32.mrb[0].mxu0
    %v1186 = vadd.f32 %v1115, %v1185
    %v1187 = vpop.f32.mrb[0].mxu0
    %1188 = vdwg.mxu0
    %1189 = vst [vmem:[#allocation10] sm:$0x3] %v1186
    // Predicated region
    $region30: #{nli_forward_padded.1} parent=1 // pred_check
      _
    $region31: #{nli_forward_padded.1} parent=1 // pred_check_branch
      %1191 = sbr.rel (0) target = $region33
    $region32: #{nli_forward_padded.1} parent=1 // pred_region
      %s1193 = ssub.s32 32, 32
      %1194 = vsyncadd [#allocation5], %s1193
      %s1196 = sshll.u32 [#allocation10], 4
      %s1197 = int_to_ptr.vmem [resolvable:$true] %s1196
      %1199 = dma.vmem_to_hbm [thread:$0]  %s1197, 32, %s4, [#allocation5]
    $region33: #{nli_forward_padded.1} parent=1 // pred_fallthru
      _
    // Predicated region
    $region34: #{nli_forward_padded.1} parent=1 // pred_check
      _
    $region35: #{nli_forward_padded.1} parent=1 // pred_check_branch
      %1201 = sbr.rel (0) target = $region37
    $region36: #{nli_forward_padded.1} parent=1 // pred_region
      %1202 = dma.done [#allocation5], 32
    $region37: #{nli_forward_padded.1} parent=1 // pred_fallthru
      _
    %1203 = vsyncpa [#allocation4], 1
    %1204 = vsyncpa [#allocation5], 1
    %1205 = vsyncpa [#allocation6], 1
    %1206 = vsyncpa [#allocation8], 1

</llo_original>
